<compile_context>
chip_gen: v6e
topology: v6e:2x2x1
jax: 0.10.0
libtpu: 0.0.40
codegen_flags: <defaults>
</compile_context>

<pallas_src>
import functools

import jax
import jax.numpy as jnp
from jax import lax
from jax.experimental import pallas as pl
from jax.experimental.pallas import tpu as pltpu


def _round_up(x, m):
    return (x + m - 1) // m * m


def resblock_kernel(L, fuse_taps, x_ref, w1_ref, b1_ref, w2_ref, b2_ref, o_ref):
    """One grid step = `nb` whole samples (R = nb*L rows, sample aligned)."""
    x = x_ref[...]                                   # (R, Cp), compute dtype
    R = x.shape[0]

    # Per-row position inside its sample. Blocks are sample aligned, so the
    # roll-based neighbor reads only need masking at sample boundaries.
    pos = lax.broadcasted_iota(jnp.int32, (R, 1), 0) % L
    not_first = pos != 0            # row has a valid left  neighbor (same sample)
    not_last = pos != (L - 1)       # row has a valid right neighbor (same sample)

    # Weights / biases are VMEM resident across the grid (constant index_map);
    # load them once per kernel invocation (no per-conv recompute/cast).
    w1 = w1_ref[...]                                 # (3*Cp, Pp), BN1 scale folded
    w2 = w2_ref[...]                                 # (3*Pp, Pp), BN2 scale folded
    b1 = b1_ref[...]                                 # (1, Pp) float32
    b2 = b2_ref[...]                                 # (1, Pp) float32

    def conv3(v, w):
        # result_left[i]  = v[i-1]  -> roll by +1
        # result_right[i] = v[i+1]  -> roll by -1  (== positive roll of R-1)
        vl = jnp.where(not_first, pltpu.roll(v, shift=1, axis=0), 0).astype(v.dtype)
        vr = jnp.where(not_last, pltpu.roll(v, shift=R - 1, axis=0), 0).astype(v.dtype)
        c = v.shape[1]
        if fuse_taps:
            # Single MXU pass with K = 3*C: 3x fewer MXU issues for small C.
            cat = jnp.concatenate([vl, v, vr], axis=-1)          # (R, 3*C)
            return jnp.dot(cat, w, preferred_element_type=jnp.float32)
        # Three K=C matmuls (used once C already fills the MXU depth).
        return (jnp.dot(vl, w[0:c], preferred_element_type=jnp.float32)
                + jnp.dot(v, w[c:2 * c], preferred_element_type=jnp.float32)
                + jnp.dot(vr, w[2 * c:3 * c], preferred_element_type=jnp.float32))

    # conv1 (BN1 scale folded into w1) -> bias -> relu
    h = jnp.maximum(conv3(x, w1) + b1, 0.0)          # f32
    h = h.astype(x.dtype)
    # conv2 (BN2 scale folded into w2) -> bias -> residual add -> relu
    out = conv3(h, w2) + b2 + x.astype(jnp.float32)
    out = jnp.maximum(out, 0.0)
    o_ref[...] = out.astype(o_ref.dtype)


def basic_res_block(x_ncl, w1, w2, bn1, bn2, *, eps=1e-5, compute_dtype=None,
                    block_samples=None, block_bytes_budget=2 * 1024 * 1024,
                    fuse_taps=None):
    """Forward pass of BasicResBlock (stride=1, downsample=None).

    x_ncl  : (N, C, L)  PyTorch NCL layout
    w1     : (P, C, 3)  conv1 weight (PyTorch OIK layout)
    w2     : (P, P, 3)  conv2 weight
    bn1/2  : (gamma, beta, running_mean, running_var), each shape (P,)
    """
    N, C, L = x_ncl.shape
    P = w1.shape[0]
    assert w1.shape == (P, C, 3) and w2.shape == (P, P, 3)
    assert C == P, "downsample is None => residual requires inplanes == planes"
    if compute_dtype is None:
        compute_dtype = x_ncl.dtype
    compute_dtype = jnp.dtype(compute_dtype)

    Cp = _round_up(C, 128)       # lane-dense channels
    Pp = _round_up(P, 128)
    if fuse_taps is None:
        fuse_taps = Cp <= 128    # fuse taps only where K=C underfills the MXU

    # ---- relayout: channels-last, flatten (N, L) -> rows, pad lanes --------
    x2d = jnp.transpose(x_ncl, (0, 2, 1)).reshape(N * L, C)
    x2d = jnp.pad(x2d, ((0, 0), (0, Cp - C))).astype(compute_dtype)

    # ---- fold BN (inference) scale into conv weights; keep only the bias ---
    def bn_affine(bn):
        g, b, m, v = bn
        s = g.astype(jnp.float32) / jnp.sqrt(v.astype(jnp.float32) + eps)
        return s, b.astype(jnp.float32) - m.astype(jnp.float32) * s

    s1, bias1 = bn_affine(bn1)
    s2, bias2 = bn_affine(bn2)

    def prep_w(w, s, cin, cin_pad, cout, cout_pad):
        # (cout, cin, 3) -> (3, cin, cout), BN scale folded per output channel
        # (trace-time constant fold on tiny tensors), padded and tap-stacked
        # into a single (3*cin_pad, cout_pad) RHS.
        wk = jnp.transpose(w, (2, 1, 0)).astype(jnp.float32) * s[None, None, :]
        wk = jnp.pad(wk, ((0, 0), (0, cin_pad - cin), (0, cout_pad - cout)))
        return wk.reshape(3 * cin_pad, cout_pad).astype(compute_dtype)

    w1s = prep_w(w1, s1, C, Cp, P, Pp)
    w2s = prep_w(w2, s2, P, Pp, P, Pp)
    b1p = jnp.pad(bias1, (0, Pp - P)).reshape(1, Pp).astype(jnp.float32)
    b2p = jnp.pad(bias2, (0, Pp - P)).reshape(1, Pp).astype(jnp.float32)

    # ---- pick a row block = whole samples (conv never needs a halo row) ----
    per_sample_bytes = L * Cp * compute_dtype.itemsize
    if block_samples is None:
        nb = 1
        for d in range(1, N + 1):
            if N % d == 0 and d * per_sample_bytes <= block_bytes_budget:
                nb = d
    else:
        nb = int(block_samples)
        assert N % nb == 0, "block_samples must divide the batch"
    # Sublane block dim must be a multiple of 8 (or cover the full axis).
    if nb != N and (nb * L) % 8 != 0:
        nb = N
    R = nb * L
    grid = (N // nb,)

    kernel = functools.partial(resblock_kernel, L, fuse_taps)
    out2d = pl.pallas_call(
        kernel,
        out_shape=jax.ShapeDtypeStruct((N * L, Pp), x_ncl.dtype),
        grid_spec=pltpu.PrefetchScalarGridSpec(
            num_scalar_prefetch=0,
            grid=grid,
            in_specs=[
                pl.BlockSpec((R, Cp), lambda i: (i, 0)),        # activations: tiled
                pl.BlockSpec((3 * Cp, Pp), lambda i: (0, 0)),   # weights: resident
                pl.BlockSpec((1, Pp), lambda i: (0, 0)),
                pl.BlockSpec((3 * Pp, Pp), lambda i: (0, 0)),
                pl.BlockSpec((1, Pp), lambda i: (0, 0)),
            ],
            out_specs=pl.BlockSpec((R, Pp), lambda i: (i, 0)),  # lane-dense output
        ),
        compiler_params=pltpu.CompilerParams(
            # One parallel grid axis: shards sample blocks across the two
            # TensorCores on v7x; no-op (harmless) on v5e/v6e.
            dimension_semantics=("parallel",),
            # Blocks are sized well under the scoped default on every
            # generation (incl. v7x); 32 MiB keeps headroom on v5e.
            vmem_limit_bytes=32 * 1024 * 1024,
        ),
    )(x2d, w1s, b1p, w2s, b2p)

    # Drop the lane padding, back to PyTorch NCL layout.
    return jnp.transpose(out2d[:, :P].reshape(N, L, P), (0, 2, 1))


def reference(x, w1, w2, bn1, bn2, eps=1e-5):
    """Pure-JAX reference (XLA conv) for correctness checking."""
    def conv(v, w):
        return lax.conv_general_dilated(
            v, w, window_strides=(1,), padding=((1, 1),),
            dimension_numbers=("NCH", "OIH", "NCH"))

    def bn(v, p):
        g, b, m, var = p
        g, b, m, var = (a[None, :, None] for a in (g, b, m, var))
        return (v - m) / jnp.sqrt(var + eps) * g + b

    h = jax.nn.relu(bn(conv(x, w1), bn1))
    o = bn(conv(h, w2), bn2)
    return jax.nn.relu(o + x)


if __name__ == "__main__":
    key = jax.random.PRNGKey(0)
    # Shapes consistent with ResNet5000's 64-plane stride-1 residual blocks.
    N, C, L = 4, 64, 64
    P = C

    def make_block_params(k):
        kw1, kw2, kg1, kb1, km1, kv1, kg2, kb2, km2, kv2 = jax.random.split(k, 10)
        bound1 = 1.0 / (C * 3) ** 0.5
        w1 = jax.random.uniform(kw1, (P, C, 3), jnp.float32, -bound1, bound1)
        bound2 = 1.0 / (P * 3) ** 0.5
        w2 = jax.random.uniform(kw2, (P, P, 3), jnp.float32, -bound2, bound2)
        bn1 = (jax.random.uniform(kg1, (P,), jnp.float32, 0.5, 1.5),
               jax.random.normal(kb1, (P,), jnp.float32) * 0.1,
               jax.random.normal(km1, (P,), jnp.float32) * 0.1,
               jax.random.uniform(kv1, (P,), jnp.float32, 0.5, 1.5))
        bn2 = (jax.random.uniform(kg2, (P,), jnp.float32, 0.5, 1.5),
               jax.random.normal(kb2, (P,), jnp.float32) * 0.1,
               jax.random.normal(km2, (P,), jnp.float32) * 0.1,
               jax.random.uniform(kv2, (P,), jnp.float32, 0.5, 1.5))
        return w1, w2, bn1, bn2

    kx, kblk0, kblk1 = jax.random.split(key, 3)
    x = jax.random.normal(kx, (N, C, L), dtype=jnp.float32)
    blocks = [make_block_params(kblk0), make_block_params(kblk1)]

    # Pallas forward: two stacked stride-1 blocks (the tail of a ResNet5000
    # layer). block_samples=2 -> grid of 2 pipelined, parallel sample blocks.
    out = x
    for (w1, w2, bn1, bn2) in blocks:
        out = basic_res_block(out, w1, w2, bn1, bn2, block_samples=2)
    out = jax.block_until_ready(out)

    # Pure-JAX reference.
    ref = x
    for (w1, w2, bn1, bn2) in blocks:
        ref = reference(ref, w1, w2, bn1, bn2)
    ref = jax.block_until_ready(ref)

    assert out.shape == (N, P, L)
    max_err = jnp.max(jnp.abs(out - ref))
    assert jnp.allclose(out, ref, atol=1e-4, rtol=1e-4), f"max abs err {max_err}"

    # bf16 operand path (v6e/v7x MXU feed): smoke test that it lowers and runs.
    xb = x.astype(jnp.bfloat16)
    w1, w2, bn1, bn2 = blocks[0]
    out_bf16 = basic_res_block(xb, w1, w2, bn1, bn2, block_samples=2)
    out_bf16 = jax.block_until_ready(out_bf16)
    assert out_bf16.shape == (N, P, L)
    assert bool(jnp.isfinite(out_bf16.astype(jnp.float32)).all())

    print("KERNEL_OK")
</pallas_src>

<mosaic_0001>
module attributes {stable_mosaic.version = 11 : i64} {
  func.func @resblock_kernel(%arg0: i32, %arg1: memref<128x128xf32, #tpu.memory_space<vmem>>, %arg2: memref<384x128xf32, #tpu.memory_space<vmem>>, %arg3: memref<1x128xf32, #tpu.memory_space<vmem>>, %arg4: memref<384x128xf32, #tpu.memory_space<vmem>>, %arg5: memref<1x128xf32, #tpu.memory_space<vmem>>, %arg6: memref<128x128xf32, #tpu.memory_space<vmem>>) attributes {dimension_semantics = [#tpu.dimension_semantics<parallel>], iteration_bounds = array<i64: 2>, scalar_prefetch = 0 : i64, scratch_operands = 0 : i64, tpu.core_type = #tpu.core_type<tc>, window_params = [{transform_indices = @transform_0, window_bounds = array<i64: 128, 128>}, {pipeline_mode = #tpu.pipeline_mode<synchronous>, transform_indices = @transform_1, window_bounds = array<i64: 384, 128>}, {pipeline_mode = #tpu.pipeline_mode<synchronous>, transform_indices = @transform_2, window_bounds = array<i64: 1, 128>}, {pipeline_mode = #tpu.pipeline_mode<synchronous>, transform_indices = @transform_3, window_bounds = array<i64: 384, 128>}, {pipeline_mode = #tpu.pipeline_mode<synchronous>, transform_indices = @transform_4, window_bounds = array<i64: 1, 128>}, {transform_indices = @transform_5, window_bounds = array<i64: 128, 128>}]} {
    %c0 = arith.constant 0 : index
    %c0_0 = arith.constant 0 : index
    %0 = vector.load %arg1[%c0, %c0_0] : memref<128x128xf32, #tpu.memory_space<vmem>>, vector<128x128xf32>
    %1 = tpu.iota {dimensions = array<i32: 0>} : vector<128x1xi32>
    %c64_i32 = arith.constant 64 : i32
    %c0_i32 = arith.constant 0 : i32
    %2 = arith.cmpi eq, %c64_i32, %c0_i32 : i32
    %c1_i32 = arith.constant 1 : i32
    %3 = arith.select %2, %c1_i32, %c64_i32 : i32
    %4 = vector.broadcast %3 : i32 to vector<128x1xi32>
    %5 = arith.remsi %1, %4 : vector<128x1xi32>
    %c0_i32_1 = arith.constant 0 : i32
    %6 = vector.broadcast %c0_i32_1 : i32 to vector<128x1xi32>
    %7 = arith.cmpi ne, %5, %6 : vector<128x1xi32>
    %c0_i32_2 = arith.constant 0 : i32
    %8 = vector.broadcast %c0_i32_2 : i32 to vector<128x1xi32>
    %9 = arith.cmpi slt, %5, %8 : vector<128x1xi32>
    %c0_i32_3 = arith.constant 0 : i32
    %10 = arith.cmpi slt, %3, %c0_i32_3 : i32
    %11 = vector.broadcast %10 : i1 to vector<128x1xi1>
    %12 = vector.broadcast %11 : vector<128x1xi1> to vector<128x1xi1>
    %13 = arith.xori %9, %12 : vector<128x1xi1>
    %14 = arith.andi %13, %7 : vector<128x1xi1>
    %15 = vector.broadcast %3 : i32 to vector<128x1xi32>
    %16 = arith.addi %5, %15 : vector<128x1xi32>
    %17 = arith.select %14, %16, %5 : vector<128x1xi1>, vector<128x1xi32>
    %c0_i32_4 = arith.constant 0 : i32
    %18 = vector.broadcast %c0_i32_4 : i32 to vector<128x1xi32>
    %19 = arith.cmpi ne, %17, %18 : vector<128x1xi32>
    %c63_i32 = arith.constant 63 : i32
    %20 = vector.broadcast %c63_i32 : i32 to vector<128x1xi32>
    %21 = arith.cmpi ne, %17, %20 : vector<128x1xi32>
    %c0_5 = arith.constant 0 : index
    %c0_6 = arith.constant 0 : index
    %22 = vector.load %arg2[%c0_5, %c0_6] : memref<384x128xf32, #tpu.memory_space<vmem>>, vector<384x128xf32>
    %c0_7 = arith.constant 0 : index
    %c0_8 = arith.constant 0 : index
    %23 = vector.load %arg4[%c0_7, %c0_8] : memref<384x128xf32, #tpu.memory_space<vmem>>, vector<384x128xf32>
    %c0_9 = arith.constant 0 : index
    %c0_10 = arith.constant 0 : index
    %24 = vector.load %arg3[%c0_9, %c0_10] : memref<1x128xf32, #tpu.memory_space<vmem>>, vector<1x128xf32>
    %c0_11 = arith.constant 0 : index
    %c0_12 = arith.constant 0 : index
    %25 = vector.load %arg5[%c0_11, %c0_12] : memref<1x128xf32, #tpu.memory_space<vmem>>, vector<1x128xf32>
    %c1_i32_13 = arith.constant 1 : i32
    %26 = tpu.dynamic_rotate %0 by %c1_i32_13 dim 0 : vector<128x128xf32>, i32 -> vector<128x128xf32>
    %c0_i32_14 = arith.constant 0 : i32
    %27 = arith.sitofp %c0_i32_14 : i32 to f32
    %28 = vector.shape_cast %19 : vector<128x1xi1> to vector<128x1xi1>
    %29 = vector.broadcast %28 : vector<128x1xi1> to vector<128x128xi1>
    %30 = vector.broadcast %27 : f32 to vector<128x128xf32>
    %31 = arith.select %29, %26, %30 : vector<128x128xi1>, vector<128x128xf32>
    %c127_i32 = arith.constant 127 : i32
    %32 = tpu.dynamic_rotate %0 by %c127_i32 dim 0 : vector<128x128xf32>, i32 -> vector<128x128xf32>
    %c0_i32_15 = arith.constant 0 : i32
    %33 = arith.sitofp %c0_i32_15 : i32 to f32
    %34 = vector.shape_cast %21 : vector<128x1xi1> to vector<128x1xi1>
    %35 = vector.broadcast %34 : vector<128x1xi1> to vector<128x128xi1>
    %36 = vector.broadcast %33 : f32 to vector<128x128xf32>
    %37 = arith.select %35, %32, %36 : vector<128x128xi1>, vector<128x128xf32>
    %38 = tpu.concatenate %31, %0, %37 in 1 : vector<128x128xf32>, vector<128x128xf32>, vector<128x128xf32> -> vector<128x384xf32>
    %cst = arith.constant dense<0.000000e+00> : vector<128x128xf32>
    %39 = tpu.matmul %38, %22, %cst {dimension_numbers = #tpu.dot_dimension_numbers<[1], [0], [0], [1], [0, 0, 1, 1], [], []>} : vector<128x384xf32>, vector<384x128xf32>, vector<128x128xf32> -> vector<128x128xf32>
    %40 = vector.broadcast %24 : vector<1x128xf32> to vector<128x128xf32>
    %41 = arith.addf %39, %40 : vector<128x128xf32>
    %cst_16 = arith.constant 0.000000e+00 : f32
    %42 = vector.broadcast %cst_16 : f32 to vector<128x128xf32>
    %43 = arith.maximumf %41, %42 : vector<128x128xf32>
    %c1_i32_17 = arith.constant 1 : i32
    %44 = tpu.dynamic_rotate %43 by %c1_i32_17 dim 0 : vector<128x128xf32>, i32 -> vector<128x128xf32>
    %c0_i32_18 = arith.constant 0 : i32
    %45 = arith.sitofp %c0_i32_18 : i32 to f32
    %46 = vector.shape_cast %19 : vector<128x1xi1> to vector<128x1xi1>
    %47 = vector.broadcast %46 : vector<128x1xi1> to vector<128x128xi1>
    %48 = vector.broadcast %45 : f32 to vector<128x128xf32>
    %49 = arith.select %47, %44, %48 : vector<128x128xi1>, vector<128x128xf32>
    %c127_i32_19 = arith.constant 127 : i32
    %50 = tpu.dynamic_rotate %43 by %c127_i32_19 dim 0 : vector<128x128xf32>, i32 -> vector<128x128xf32>
    %c0_i32_20 = arith.constant 0 : i32
    %51 = arith.sitofp %c0_i32_20 : i32 to f32
    %52 = vector.shape_cast %21 : vector<128x1xi1> to vector<128x1xi1>
    %53 = vector.broadcast %52 : vector<128x1xi1> to vector<128x128xi1>
    %54 = vector.broadcast %51 : f32 to vector<128x128xf32>
    %55 = arith.select %53, %50, %54 : vector<128x128xi1>, vector<128x128xf32>
    %56 = tpu.concatenate %49, %43, %55 in 1 : vector<128x128xf32>, vector<128x128xf32>, vector<128x128xf32> -> vector<128x384xf32>
    %cst_21 = arith.constant dense<0.000000e+00> : vector<128x128xf32>
    %57 = tpu.matmul %56, %23, %cst_21 {dimension_numbers = #tpu.dot_dimension_numbers<[1], [0], [0], [1], [0, 0, 1, 1], [], []>} : vector<128x384xf32>, vector<384x128xf32>, vector<128x128xf32> -> vector<128x128xf32>
    %58 = vector.broadcast %25 : vector<1x128xf32> to vector<128x128xf32>
    %59 = arith.addf %57, %58 : vector<128x128xf32>
    %60 = arith.addf %59, %0 : vector<128x128xf32>
    %cst_22 = arith.constant 0.000000e+00 : f32
    %61 = vector.broadcast %cst_22 : f32 to vector<128x128xf32>
    %62 = arith.maximumf %60, %61 : vector<128x128xf32>
    %c0_23 = arith.constant 0 : index
    %c0_24 = arith.constant 0 : index
    %63 = vector.load %arg6[%c0_23, %c0_24] : memref<128x128xf32, #tpu.memory_space<vmem>>, vector<128x128xf32>
    tpu.vector_store %arg6[%c0_23, %c0_24], %62 {strides = array<i32>} : memref<128x128xf32, #tpu.memory_space<vmem>>, vector<128x128xf32>,
    return
  }
  func.func @transform_0(%arg0: i32) -> (i32, i32) {
    %c0_i32 = arith.constant 0 : i32
    %c0_i32_0 = arith.constant 0 : i32
    return %arg0, %c0_i32 : i32, i32
  }
  func.func @transform_1(%arg0: i32) -> (i32, i32) {
    %c0_i32 = arith.constant 0 : i32
    %c0_i32_0 = arith.constant 0 : i32
    %c0_i32_1 = arith.constant 0 : i32
    return %c0_i32, %c0_i32_0 : i32, i32
  }
  func.func @transform_2(%arg0: i32) -> (i32, i32) {
    %c0_i32 = arith.constant 0 : i32
    %c0_i32_0 = arith.constant 0 : i32
    %c0_i32_1 = arith.constant 0 : i32
    return %c0_i32, %c0_i32_0 : i32, i32
  }
  func.func @transform_3(%arg0: i32) -> (i32, i32) {
    %c0_i32 = arith.constant 0 : i32
    %c0_i32_0 = arith.constant 0 : i32
    %c0_i32_1 = arith.constant 0 : i32
    return %c0_i32, %c0_i32_0 : i32, i32
  }
  func.func @transform_4(%arg0: i32) -> (i32, i32) {
    %c0_i32 = arith.constant 0 : i32
    %c0_i32_0 = arith.constant 0 : i32
    %c0_i32_1 = arith.constant 0 : i32
    return %c0_i32, %c0_i32_0 : i32, i32
  }
  func.func @transform_5(%arg0: i32) -> (i32, i32) {
    %c0_i32 = arith.constant 0 : i32
    %c0_i32_0 = arith.constant 0 : i32
    return %arg0, %c0_i32 : i32, i32
  }
}

</mosaic_0001>

<llo_original>
// kernel: tpu_custom_call.1
$region0: #{tpu_custom_call.1}
  #allocation0 [shape = 'u32[]', space=smem, size = 0x4, offset = 0x4, fixed_abs, tag = 'smem constant byte address 0x4 - core index']
  #allocation1 [shape = 'u32[144,128]{1,0:T(1,128)}', space=vmem, size = 0x12000, scoped, tag = 'internal scratch']
  %s0 = inlined_call_operand.hbm [shape: f32[256,128], index: 0, kind: input, shape index: {}]
  %s1 = inlined_call_operand.hbm [shape: f32[384,128], index: 1, kind: input, shape index: {}]
  %s2 = inlined_call_operand.vmem [shape: f32[1,128], index: 2, kind: input, shape index: {}]
  %s3 = inlined_call_operand.hbm [shape: f32[384,128], index: 3, kind: input, shape index: {}]
  %s4 = inlined_call_operand.vmem [shape: f32[1,128], index: 4, kind: input, shape index: {}]
  %s5 = inlined_call_operand.hbm [shape: f32[256,128], index: 5, kind: output, shape index: {}]
  %s6 = sld [smem:[#allocation0]]
  $region65: #{tpu_custom_call.1} parent=0
    _
  %s8 = ssub.s32 1, %s6
  %s9 = scalar_select 0, %s8, %s6
  $region1: #{tpu_custom_call.1} parent=0
    #allocation2 [shape = 'u8[131072]{0}', space=vmem, size = 0x20000, scoped, tag = 'input window, operand 0']
    #allocation3 [shape = 's32[2]{0}', space=sflag, size = 0x8, scoped, tag = 'scoped memory for tpu_custom_call.1']
    #allocation4 [shape = 's32[2]{0}', space=sflag, size = 0x8, scoped, tag = 'scoped memory for tpu_custom_call.1']
    #allocation5 [shape = 'u8[196608]{0}', space=vmem, size = 0x30000, scoped, tag = 'input window, operand 1, single buffered']
    #allocation6 [shape = 's32[1]{0}', space=sflag, size = 0x4, scoped, tag = 'scoped memory for tpu_custom_call.1']
    #allocation7 [shape = 'u8[196608]{0}', space=vmem, size = 0x30000, scoped, tag = 'input window, operand 3, single buffered']
    #allocation8 [shape = 'u8[131072]{0}', space=vmem, size = 0x20000, scoped, tag = 'output window, operand 0']
    %10 = vsyncpa [#allocation3], 0
    %s11 = scalar_lea.sflag [#allocation3], 1
    %12 = vsyncpa %s11, 0
    %13 = vsyncpa [#allocation6], 0
    %14 = vsyncpa [#allocation4], 0
    %s15 = scalar_lea.sflag [#allocation4], 1
    %16 = vsyncpa %s15, 0
    loop: start=0, step=1, limit=4
    $region2: #{tpu_custom_call.1} parent=1 // loop_pre_header
      _
    $region3: #{tpu_custom_call.1} parent=1 // loop_header
      %s18 = sphi 0, %s22
      %p19 = scmp.ge.s32.totalorder %s18, 4
      %s28 = sphi 0, %s30
      %s31 = sphi 0, %s28
      %s32 = sphi 0, %s31
      %s48 = sphi 0, %s32
      %s52 = sphi 0, %s52
      %s54 = sphi 0, %s52
      %s55 = sphi 0, %s54
      %s69 = sphi 0, %s55
      %s73 = sphi 0, %s73
      %s75 = sphi 0, %s73
      %s76 = sphi 0, %s75
      %s90 = sphi 0, %s76
      %s94 = sphi 0, %s94
      %s96 = sphi 0, %s94
      %s97 = sphi 0, %s96
      %s111 = sphi 0, %s97
      %s115 = sphi 0, %s115
      %s117 = sphi 0, %s115
      %s118 = sphi 0, %s117
      %s132 = sphi 0, %s118
      %s138 = sphi 0, %s140
      %s141 = sphi 0, %s138
      %s142 = sphi 0, %s141
      %s158 = sphi 0, %s142
    $region4: #{tpu_custom_call.1} parent=1 // loop_header_branch
      %21 = sbr.rel (%p19) target = $region8
    $region5: #{tpu_custom_call.1} parent=1 // loop_body
      %s23 = ssub.s32 %s18, 1
      %s24 = ssub.s32 %s18, 2
      %s25 = sadd.s32 %s18, 1
      %s26 = ssub.s32 %s18, %s25
      %p27 = scmp.eq.s32.totalorder %s26, 0
      %s29 = sadd.s32 %s28, 1
      %s30 = scalar_select %p27, %s28, %s29
      %p33 = pneg %p27
      %p34 = scmp.eq.s32.totalorder %s18, 1
      %p35 = por %p33, %p34
      %p36 = scmp.ne.s32.totalorder %s28, %s31
      %p37 = scmp.eq.s32.totalorder %s18, 0
      %p38 = por %p36, %p37
      %p39 = scmp.ne.s32.totalorder %s28, %s31
      %p40 = scmp.eq.s32.totalorder %s23, 1
      %p41 = por %p39, %p40
      %p42 = scmp.ne.s32.totalorder %s31, %s32
      %p43 = scmp.eq.s32.totalorder %s23, 0
      %p44 = por %p42, %p43
      %p45 = scmp.ne.s32.totalorder %s31, %s32
      %p46 = scmp.eq.s32.totalorder %s24, 1
      %p47 = por %p45, %p46
      %p49 = scmp.ne.s32.totalorder %s32, %s48
      %p50 = scmp.eq.s32.totalorder %s24, 0
      %p51 = por %p49, %p50
      %s53 = sadd.s32 %s52, 1
      %p56 = scmp.eq.s32.totalorder %s18, 1
      %p57 = scmp.ne.s32.totalorder %s52, %s54
      %p58 = scmp.eq.s32.totalorder %s18, 0
      %p59 = por %p57, %p58
      %p60 = scmp.ne.s32.totalorder %s52, %s54
      %p61 = scmp.eq.s32.totalorder %s23, 1
      %p62 = por %p60, %p61
      %p63 = scmp.ne.s32.totalorder %s54, %s55
      %p64 = scmp.eq.s32.totalorder %s23, 0
      %p65 = por %p63, %p64
      %p66 = scmp.ne.s32.totalorder %s54, %s55
      %p67 = scmp.eq.s32.totalorder %s24, 1
      %p68 = por %p66, %p67
      %p70 = scmp.ne.s32.totalorder %s55, %s69
      %p71 = scmp.eq.s32.totalorder %s24, 0
      %p72 = por %p70, %p71
      %s74 = sadd.s32 %s73, 1
      %p77 = scmp.eq.s32.totalorder %s18, 1
      %p78 = scmp.ne.s32.totalorder %s73, %s75
      %p79 = scmp.eq.s32.totalorder %s18, 0
      %p80 = por %p78, %p79
      %p81 = scmp.ne.s32.totalorder %s73, %s75
      %p82 = scmp.eq.s32.totalorder %s23, 1
      %p83 = por %p81, %p82
      %p84 = scmp.ne.s32.totalorder %s75, %s76
      %p85 = scmp.eq.s32.totalorder %s23, 0
      %p86 = por %p84, %p85
      %p87 = scmp.ne.s32.totalorder %s75, %s76
      %p88 = scmp.eq.s32.totalorder %s24, 1
      %p89 = por %p87, %p88
      %p91 = scmp.ne.s32.totalorder %s76, %s90
      %p92 = scmp.eq.s32.totalorder %s24, 0
      %p93 = por %p91, %p92
      %s95 = sadd.s32 %s94, 1
      %p98 = scmp.eq.s32.totalorder %s18, 1
      %p99 = scmp.ne.s32.totalorder %s94, %s96
      %p100 = scmp.eq.s32.totalorder %s18, 0
      %p101 = por %p99, %p100
      %p102 = scmp.ne.s32.totalorder %s94, %s96
      %p103 = scmp.eq.s32.totalorder %s23, 1
      %p104 = por %p102, %p103
      %p105 = scmp.ne.s32.totalorder %s96, %s97
      %p106 = scmp.eq.s32.totalorder %s23, 0
      %p107 = por %p105, %p106
      %p108 = scmp.ne.s32.totalorder %s96, %s97
      %p109 = scmp.eq.s32.totalorder %s24, 1
      %p110 = por %p108, %p109
      %p112 = scmp.ne.s32.totalorder %s97, %s111
      %p113 = scmp.eq.s32.totalorder %s24, 0
      %p114 = por %p112, %p113
      %s116 = sadd.s32 %s115, 1
      %p119 = scmp.eq.s32.totalorder %s18, 1
      %p120 = scmp.ne.s32.totalorder %s115, %s117
      %p121 = scmp.eq.s32.totalorder %s18, 0
      %p122 = por %p120, %p121
      %p123 = scmp.ne.s32.totalorder %s115, %s117
      %p124 = scmp.eq.s32.totalorder %s23, 1
      %p125 = por %p123, %p124
      %p126 = scmp.ne.s32.totalorder %s117, %s118
      %p127 = scmp.eq.s32.totalorder %s23, 0
      %p128 = por %p126, %p127
      %p129 = scmp.ne.s32.totalorder %s117, %s118
      %p130 = scmp.eq.s32.totalorder %s24, 1
      %p131 = por %p129, %p130
      %p133 = scmp.ne.s32.totalorder %s118, %s132
      %p134 = scmp.eq.s32.totalorder %s24, 0
      %p135 = por %p133, %p134
      %s136 = ssub.s32 %s18, %s25
      %p137 = scmp.eq.s32.totalorder %s136, 0
      %s139 = sadd.s32 %s138, 1
      %s140 = scalar_select %p137, %s138, %s139
      %p143 = pneg %p137
      %p144 = scmp.eq.s32.totalorder %s18, 1
      %p145 = por %p143, %p144
      %p146 = scmp.ne.s32.totalorder %s138, %s141
      %p147 = scmp.eq.s32.totalorder %s18, 0
      %p148 = por %p146, %p147
      %p149 = scmp.ne.s32.totalorder %s138, %s141
      %p150 = scmp.eq.s32.totalorder %s23, 1
      %p151 = por %p149, %p150
      %p152 = scmp.ne.s32.totalorder %s141, %s142
      %p153 = scmp.eq.s32.totalorder %s23, 0
      %p154 = por %p152, %p153
      %p155 = scmp.ne.s32.totalorder %s141, %s142
      %p156 = scmp.eq.s32.totalorder %s24, 1
      %p157 = por %p155, %p156
      %p159 = scmp.ne.s32.totalorder %s142, %s158
      %p160 = scmp.eq.s32.totalorder %s24, 0
      %p161 = por %p159, %p160
      %p162 = scmp.le.s32.totalorder 1, %s18
      %p163 = scmp.lt.s32.totalorder %s18, 3
      %p164 = pnand %p162, %p163
      %p165 = pneg %p164
      // Predicated region
      $region9: #{tpu_custom_call.1} parent=5 // pred_check
        _
      $region10: #{tpu_custom_call.1} parent=5 // pred_check_branch
        %167 = sbr.rel (%p164) target = $region12
      $region11: #{tpu_custom_call.1} parent=5 // pred_region
        %s168 = ssub.s32 %s18, 1
        // Predicated region
        $region13: #{tpu_custom_call.1} parent=11 // pred_check
          %p169 = pneg %p65
        $region14: #{tpu_custom_call.1} parent=11 // pred_check_branch
          %171 = sbr.rel (%p169) target = $region16
        $region15: #{tpu_custom_call.1} parent=11 // pred_region
          %s173 = ssub.s32 6144, 6144
          %174 = vsyncadd [#allocation6], %s173
          %s175 = sshll.u32 [#allocation5], 4
          %s176 = int_to_ptr.vmem [resolvable:$true] %s175
          %181 = dma.hbm_to_vmem [thread:$0]  %s1, 6144, %s176, [#allocation6], 128, 128, 8
        $region16: #{tpu_custom_call.1} parent=11 // pred_fallthru
          _
        // Predicated region
        $region17: #{tpu_custom_call.1} parent=11 // pred_check
          %p182 = pneg %p86
        $region18: #{tpu_custom_call.1} parent=11 // pred_check_branch
          %184 = sbr.rel (%p182) target = $region20
        $region19: #{tpu_custom_call.1} parent=11 // pred_region
          _
        $region20: #{tpu_custom_call.1} parent=11 // pred_fallthru
          _
        // Predicated region
        $region21: #{tpu_custom_call.1} parent=11 // pred_check
          %p185 = pneg %p107
        $region22: #{tpu_custom_call.1} parent=11 // pred_check_branch
          %187 = sbr.rel (%p185) target = $region24
        $region23: #{tpu_custom_call.1} parent=11 // pred_region
          %s189 = ssub.s32 6144, 6144
          %190 = vsyncadd [#allocation6], %s189
          %s191 = sshll.u32 [#allocation7], 4
          %s192 = int_to_ptr.vmem [resolvable:$true] %s191
          %197 = dma.hbm_to_vmem [thread:$0]  %s3, 6144, %s192, [#allocation6], 128, 128, 8
        $region24: #{tpu_custom_call.1} parent=11 // pred_fallthru
          _
        // Predicated region
        $region25: #{tpu_custom_call.1} parent=11 // pred_check
          %p198 = pneg %p128
        $region26: #{tpu_custom_call.1} parent=11 // pred_check_branch
          %200 = sbr.rel (%p198) target = $region28
        $region27: #{tpu_custom_call.1} parent=11 // pred_region
          _
        $region28: #{tpu_custom_call.1} parent=11 // pred_fallthru
          _
      $region12: #{tpu_custom_call.1} parent=5 // pred_fallthru
        _
      %p201 = scmp.lt.s32.totalorder %s18, 2
      // Predicated region
      $region29: #{tpu_custom_call.1} parent=5 // pred_check
        %p202 = pneg %p201
      $region30: #{tpu_custom_call.1} parent=5 // pred_check_branch
        %204 = sbr.rel (%p202) target = $region32
      $region31: #{tpu_custom_call.1} parent=5 // pred_region
        // Predicated region
        $region33: #{tpu_custom_call.1} parent=31 // pred_check
          %p205 = pneg %p38
        $region34: #{tpu_custom_call.1} parent=31 // pred_check_branch
          %207 = sbr.rel (%p205) target = $region36
        $region35: #{tpu_custom_call.1} parent=31 // pred_region
          %s208 = sand.u32 %s28, 1
          %s209 = scalar_lea.sflag [#allocation3], %s208
          %s210 = sand.u32 %s28, 1
          %s211 = smul.addr %s210, 128
          %s212 = scalar_lea.vmem [#allocation2], %s211
          %s213 = smul.u32 16, %s18
          %s215 = ssub.s32 2048, 2048
          %216 = vsyncadd %s209, %s215
          %s217 = smul.addr %s213, 128
          %s218 = scalar_lea.hbm %s0, %s217
          %s219 = sshll.u32 %s212, 4
          %s220 = int_to_ptr.vmem [resolvable:$true] %s219
          %225 = dma.hbm_to_vmem [thread:$0]  %s218, 2048, %s220, %s209, 128, 128, 8
        $region36: #{tpu_custom_call.1} parent=31 // pred_fallthru
          _
      $region32: #{tpu_custom_call.1} parent=5 // pred_fallthru
        _
      %p226 = scmp.le.s32.totalorder 1, %s18
      %p227 = scmp.lt.s32.totalorder %s18, 3
      %p228 = pnand %p226, %p227
      %p229 = pneg %p228
      // Predicated region
      $region37: #{tpu_custom_call.1} parent=5 // pred_check
        _
      $region38: #{tpu_custom_call.1} parent=5 // pred_check_branch
        %231 = sbr.rel (%p228) target = $region40
      $region39: #{tpu_custom_call.1} parent=5 // pred_region
        %s232 = ssub.s32 %s18, 1
        %s233 = sand.u32 %s31, 1
        %s234 = scalar_lea.sflag [#allocation3], %s233
        %s235 = sand.u32 %s31, 1
        %s236 = smul.addr %s235, 128
        %s237 = scalar_lea.vmem [#allocation2], %s236
        // Predicated region
        $region41: #{tpu_custom_call.1} parent=39 // pred_check
          %p238 = pneg %p44
        $region42: #{tpu_custom_call.1} parent=39 // pred_check_branch
          %240 = sbr.rel (%p238) target = $region44
        $region43: #{tpu_custom_call.1} parent=39 // pred_region
          %241 = dma.done %s234, 2048
        $region44: #{tpu_custom_call.1} parent=39 // pred_fallthru
          _
        // Predicated region
        $region45: #{tpu_custom_call.1} parent=39 // pred_check
          %p242 = pneg %p65
        $region46: #{tpu_custom_call.1} parent=39 // pred_check_branch
          %244 = sbr.rel (%p242) target = $region48
        $region47: #{tpu_custom_call.1} parent=39 // pred_region
          %245 = dma.done [#allocation6], 6144
        $region48: #{tpu_custom_call.1} parent=39 // pred_fallthru
          _
        // Predicated region
        $region49: #{tpu_custom_call.1} parent=39 // pred_check
          %p246 = pneg %p107
        $region50: #{tpu_custom_call.1} parent=39 // pred_check_branch
          %248 = sbr.rel (%p246) target = $region52
        $region51: #{tpu_custom_call.1} parent=39 // pred_region
          %249 = dma.done [#allocation6], 6144
        $region52: #{tpu_custom_call.1} parent=39 // pred_fallthru
          _
        %s250 = sand.u32 %s31, 1
        %s251 = scalar_lea.sflag [#allocation3], %s250
        %s252 = sand.u32 %s31, 1
        %s253 = smul.addr %s252, 128
        %s254 = scalar_lea.vmem [#allocation2], %s253
        %p255 = pneg %p44
        %p256 = pneg %p41
        %p257 = pneg %p65
        %p258 = pneg %p62
        %p259 = pneg %p86
        %p260 = pneg %p83
        %p261 = pneg %p107
        %p262 = pneg %p104
        %p263 = pneg %p128
        %p264 = pneg %p125
        %p265 = pneg %p154
        %p266 = pneg %p151
        %s267 = sand.u32 %s141, 1
        %s268 = scalar_lea.sflag [#allocation4], %s267
        %s269 = sand.u32 %s141, 1
        %s270 = smul.addr %s269, 128
        %s271 = scalar_lea.vmem [#allocation8], %s270
        %s272 = smul.u32 16, %s23
        %s273 = smul.u32 16, %s23
        %v274 = vld [vmem:[%s237] sm:$0xff]
        %v275 = vld [vmem:[%s237 + $0x8] sm:$0xff]
        %v276 = vld [vmem:[%s237 + $0x10] sm:$0xff]
        %v277 = vld [vmem:[%s237 + $0x18] sm:$0xff]
        %v278 = vld [vmem:[%s237 + $0x20] sm:$0xff]
        %v279 = vld [vmem:[%s237 + $0x28] sm:$0xff]
        %v280 = vld [vmem:[%s237 + $0x30] sm:$0xff]
        %v281 = vld [vmem:[%s237 + $0x38] sm:$0xff]
        %v282 = vld [vmem:[%s237 + $0x40] sm:$0xff]
        %v283 = vld [vmem:[%s237 + $0x48] sm:$0xff]
        %v284 = vld [vmem:[%s237 + $0x50] sm:$0xff]
        %v285 = vld [vmem:[%s237 + $0x58] sm:$0xff]
        %v286 = vld [vmem:[%s237 + $0x60] sm:$0xff]
        %v287 = vld [vmem:[%s237 + $0x68] sm:$0xff]
        %v288 = vld [vmem:[%s237 + $0x70] sm:$0xff]
        %v289 = vld [vmem:[%s237 + $0x78] sm:$0xff]
        %v290 = vlaneseq
        %v291 = vshrl.u32 %v290, 7
        %v292 = vadd.s32 %v291, 8
        %v293 = vadd.s32 %v291, 16
        %v294 = vadd.s32 %v291, 24
        %v295 = vadd.s32 %v291, 32
        %v296 = vadd.s32 %v291, 40
        %v297 = vadd.s32 %v291, 48
        %v298 = vadd.s32 %v291, 56
        %v299 = vadd.s32 %v291, 64
        %v300 = vadd.s32 %v291, 72
        %v301 = vadd.s32 %v291, 80
        %v302 = vadd.s32 %v291, 88
        %v303 = vadd.s32 %v291, 96
        %v304 = vadd.s32 %v291, 104
        %v305 = vadd.s32 %v291, 112
        %v306 = vadd.s32 %v291, 120
        %vm307 = vcmp.lt.s32.totalorder %v291, 0
        %v308 = vsub.s32 0, %v291
        %v309 = vsel %vm307, %v308, %v291
        %v310 = vshrl.u32 %v309, 6
        %v311 = vand.u32 %v309, 63
        %v312 = vsub.s32 0, %v311
        %v313 = vsel %vm307, %v312, %v311
        %vm314 = vcmp.lt.s32.totalorder %v292, 0
        %v315 = vsub.s32 0, %v292
        %v316 = vsel %vm314, %v315, %v292
        %v317 = vshrl.u32 %v316, 6
        %v318 = vand.u32 %v316, 63
        %v319 = vsub.s32 0, %v318
        %v320 = vsel %vm314, %v319, %v318
        %vm321 = vcmp.lt.s32.totalorder %v293, 0
        %v322 = vsub.s32 0, %v293
        %v323 = vsel %vm321, %v322, %v293
        %v324 = vshrl.u32 %v323, 6
        %v325 = vand.u32 %v323, 63
        %v326 = vsub.s32 0, %v325
        %v327 = vsel %vm321, %v326, %v325
        %vm328 = vcmp.lt.s32.totalorder %v294, 0
        %v329 = vsub.s32 0, %v294
        %v330 = vsel %vm328, %v329, %v294
        %v331 = vshrl.u32 %v330, 6
        %v332 = vand.u32 %v330, 63
        %v333 = vsub.s32 0, %v332
        %v334 = vsel %vm328, %v333, %v332
        %vm335 = vcmp.lt.s32.totalorder %v295, 0
        %v336 = vsub.s32 0, %v295
        %v337 = vsel %vm335, %v336, %v295
        %v338 = vshrl.u32 %v337, 6
        %v339 = vand.u32 %v337, 63
        %v340 = vsub.s32 0, %v339
        %v341 = vsel %vm335, %v340, %v339
        %vm342 = vcmp.lt.s32.totalorder %v296, 0
        %v343 = vsub.s32 0, %v296
        %v344 = vsel %vm342, %v343, %v296
        %v345 = vshrl.u32 %v344, 6
        %v346 = vand.u32 %v344, 63
        %v347 = vsub.s32 0, %v346
        %v348 = vsel %vm342, %v347, %v346
        %vm349 = vcmp.lt.s32.totalorder %v297, 0
        %v350 = vsub.s32 0, %v297
        %v351 = vsel %vm349, %v350, %v297
        %v352 = vshrl.u32 %v351, 6
        %v353 = vand.u32 %v351, 63
        %v354 = vsub.s32 0, %v353
        %v355 = vsel %vm349, %v354, %v353
        %vm356 = vcmp.lt.s32.totalorder %v298, 0
        %v357 = vsub.s32 0, %v298
        %v358 = vsel %vm356, %v357, %v298
        %v359 = vshrl.u32 %v358, 6
        %v360 = vand.u32 %v358, 63
        %v361 = vsub.s32 0, %v360
        %v362 = vsel %vm356, %v361, %v360
        %vm363 = vcmp.lt.s32.totalorder %v299, 0
        %v364 = vsub.s32 0, %v299
        %v365 = vsel %vm363, %v364, %v299
        %v366 = vshrl.u32 %v365, 6
        %v367 = vand.u32 %v365, 63
        %v368 = vsub.s32 0, %v367
        %v369 = vsel %vm363, %v368, %v367
        %vm370 = vcmp.lt.s32.totalorder %v300, 0
        %v371 = vsub.s32 0, %v300
        %v372 = vsel %vm370, %v371, %v300
        %v373 = vshrl.u32 %v372, 6
        %v374 = vand.u32 %v372, 63
        %v375 = vsub.s32 0, %v374
        %v376 = vsel %vm370, %v375, %v374
        %vm377 = vcmp.lt.s32.totalorder %v301, 0
        %v378 = vsub.s32 0, %v301
        %v379 = vsel %vm377, %v378, %v301
        %v380 = vshrl.u32 %v379, 6
        %v381 = vand.u32 %v379, 63
        %v382 = vsub.s32 0, %v381
        %v383 = vsel %vm377, %v382, %v381
        %vm384 = vcmp.lt.s32.totalorder %v302, 0
        %v385 = vsub.s32 0, %v302
        %v386 = vsel %vm384, %v385, %v302
        %v387 = vshrl.u32 %v386, 6
        %v388 = vand.u32 %v386, 63
        %v389 = vsub.s32 0, %v388
        %v390 = vsel %vm384, %v389, %v388
        %vm391 = vcmp.lt.s32.totalorder %v303, 0
        %v392 = vsub.s32 0, %v303
        %v393 = vsel %vm391, %v392, %v303
        %v394 = vshrl.u32 %v393, 6
        %v395 = vand.u32 %v393, 63
        %v396 = vsub.s32 0, %v395
        %v397 = vsel %vm391, %v396, %v395
        %vm398 = vcmp.lt.s32.totalorder %v304, 0
        %v399 = vsub.s32 0, %v304
        %v400 = vsel %vm398, %v399, %v304
        %v401 = vshrl.u32 %v400, 6
        %v402 = vand.u32 %v400, 63
        %v403 = vsub.s32 0, %v402
        %v404 = vsel %vm398, %v403, %v402
        %vm405 = vcmp.lt.s32.totalorder %v305, 0
        %v406 = vsub.s32 0, %v305
        %v407 = vsel %vm405, %v406, %v305
        %v408 = vshrl.u32 %v407, 6
        %v409 = vand.u32 %v407, 63
        %v410 = vsub.s32 0, %v409
        %v411 = vsel %vm405, %v410, %v409
        %vm412 = vcmp.lt.s32.totalorder %v306, 0
        %v413 = vsub.s32 0, %v306
        %v414 = vsel %vm412, %v413, %v306
        %v415 = vshrl.u32 %v414, 6
        %v416 = vand.u32 %v414, 63
        %v417 = vsub.s32 0, %v416
        %v418 = vsel %vm412, %v417, %v416
        %vm419 = vcmp.ne.s32.totalorder %v313, 0
        %vm420 = vcmp.ne.s32.totalorder %v320, 0
        %vm421 = vcmp.ne.s32.totalorder %v327, 0
        %vm422 = vcmp.ne.s32.totalorder %v334, 0
        %vm423 = vcmp.ne.s32.totalorder %v341, 0
        %vm424 = vcmp.ne.s32.totalorder %v348, 0
        %vm425 = vcmp.ne.s32.totalorder %v355, 0
        %vm426 = vcmp.ne.s32.totalorder %v362, 0
        %vm427 = vcmp.ne.s32.totalorder %v369, 0
        %vm428 = vcmp.ne.s32.totalorder %v376, 0
        %vm429 = vcmp.ne.s32.totalorder %v383, 0
        %vm430 = vcmp.ne.s32.totalorder %v390, 0
        %vm431 = vcmp.ne.s32.totalorder %v397, 0
        %vm432 = vcmp.ne.s32.totalorder %v404, 0
        %vm433 = vcmp.ne.s32.totalorder %v411, 0
        %vm434 = vcmp.ne.s32.totalorder %v418, 0
        %vm435 = vcmp.lt.s32.totalorder %v313, 0
        %vm436 = vcmp.lt.s32.totalorder %v320, 0
        %vm437 = vcmp.lt.s32.totalorder %v327, 0
        %vm438 = vcmp.lt.s32.totalorder %v334, 0
        %vm439 = vcmp.lt.s32.totalorder %v341, 0
        %vm440 = vcmp.lt.s32.totalorder %v348, 0
        %vm441 = vcmp.lt.s32.totalorder %v355, 0
        %vm442 = vcmp.lt.s32.totalorder %v362, 0
        %vm443 = vcmp.lt.s32.totalorder %v369, 0
        %vm444 = vcmp.lt.s32.totalorder %v376, 0
        %vm445 = vcmp.lt.s32.totalorder %v383, 0
        %vm446 = vcmp.lt.s32.totalorder %v390, 0
        %vm447 = vcmp.lt.s32.totalorder %v397, 0
        %vm448 = vcmp.lt.s32.totalorder %v404, 0
        %vm449 = vcmp.lt.s32.totalorder %v411, 0
        %vm450 = vcmp.lt.s32.totalorder %v418, 0
        %vm451 = vmand %vm435, %vm419
        %vm452 = vmand %vm436, %vm420
        %vm453 = vmand %vm437, %vm421
        %vm454 = vmand %vm438, %vm422
        %vm455 = vmand %vm439, %vm423
        %vm456 = vmand %vm440, %vm424
        %vm457 = vmand %vm441, %vm425
        %vm458 = vmand %vm442, %vm426
        %vm459 = vmand %vm443, %vm427
        %vm460 = vmand %vm444, %vm428
        %vm461 = vmand %vm445, %vm429
        %vm462 = vmand %vm446, %vm430
        %vm463 = vmand %vm447, %vm431
        %vm464 = vmand %vm448, %vm432
        %vm465 = vmand %vm449, %vm433
        %vm466 = vmand %vm450, %vm434
        %v467 = vadd.s32 %v313, 64
        %v468 = vadd.s32 %v320, 64
        %v469 = vadd.s32 %v327, 64
        %v470 = vadd.s32 %v334, 64
        %v471 = vadd.s32 %v341, 64
        %v472 = vadd.s32 %v348, 64
        %v473 = vadd.s32 %v355, 64
        %v474 = vadd.s32 %v362, 64
        %v475 = vadd.s32 %v369, 64
        %v476 = vadd.s32 %v376, 64
        %v477 = vadd.s32 %v383, 64
        %v478 = vadd.s32 %v390, 64
        %v479 = vadd.s32 %v397, 64
        %v480 = vadd.s32 %v404, 64
        %v481 = vadd.s32 %v411, 64
        %v482 = vadd.s32 %v418, 64
        %v483 = vsel %vm451, %v467, %v313
        %v484 = vsel %vm452, %v468, %v320
        %v485 = vsel %vm453, %v469, %v327
        %v486 = vsel %vm454, %v470, %v334
        %v487 = vsel %vm455, %v471, %v341
        %v488 = vsel %vm456, %v472, %v348
        %v489 = vsel %vm457, %v473, %v355
        %v490 = vsel %vm458, %v474, %v362
        %v491 = vsel %vm459, %v475, %v369
        %v492 = vsel %vm460, %v476, %v376
        %v493 = vsel %vm461, %v477, %v383
        %v494 = vsel %vm462, %v478, %v390
        %v495 = vsel %vm463, %v479, %v397
        %v496 = vsel %vm464, %v480, %v404
        %v497 = vsel %vm465, %v481, %v411
        %v498 = vsel %vm466, %v482, %v418
        %vm499 = vcmp.ne.s32.totalorder %v483, 0
        %vm500 = vcmp.ne.s32.totalorder %v484, 0
        %vm501 = vcmp.ne.s32.totalorder %v485, 0
        %vm502 = vcmp.ne.s32.totalorder %v486, 0
        %vm503 = vcmp.ne.s32.totalorder %v487, 0
        %vm504 = vcmp.ne.s32.totalorder %v488, 0
        %vm505 = vcmp.ne.s32.totalorder %v489, 0
        %vm506 = vcmp.ne.s32.totalorder %v490, 0
        %vm507 = vcmp.ne.s32.totalorder %v491, 0
        %vm508 = vcmp.ne.s32.totalorder %v492, 0
        %vm509 = vcmp.ne.s32.totalorder %v493, 0
        %vm510 = vcmp.ne.s32.totalorder %v494, 0
        %vm511 = vcmp.ne.s32.totalorder %v495, 0
        %vm512 = vcmp.ne.s32.totalorder %v496, 0
        %vm513 = vcmp.ne.s32.totalorder %v497, 0
        %vm514 = vcmp.ne.s32.totalorder %v498, 0
        %vm515 = vcmp.ne.s32.totalorder %v483, 63
        %vm516 = vcmp.ne.s32.totalorder %v484, 63
        %vm517 = vcmp.ne.s32.totalorder %v485, 63
        %vm518 = vcmp.ne.s32.totalorder %v486, 63
        %vm519 = vcmp.ne.s32.totalorder %v487, 63
        %vm520 = vcmp.ne.s32.totalorder %v488, 63
        %vm521 = vcmp.ne.s32.totalorder %v489, 63
        %vm522 = vcmp.ne.s32.totalorder %v490, 63
        %vm523 = vcmp.ne.s32.totalorder %v491, 63
        %vm524 = vcmp.ne.s32.totalorder %v492, 63
        %vm525 = vcmp.ne.s32.totalorder %v493, 63
        %vm526 = vcmp.ne.s32.totalorder %v494, 63
        %vm527 = vcmp.ne.s32.totalorder %v495, 63
        %vm528 = vcmp.ne.s32.totalorder %v496, 63
        %vm529 = vcmp.ne.s32.totalorder %v497, 63
        %vm530 = vcmp.ne.s32.totalorder %v498, 63
        %v531 = vld [vmem:[#allocation5] sm:$0xff]
        %v532 = vld [vmem:[#allocation5 + $0x8] sm:$0xff]
        %v533 = vld [vmem:[#allocation5 + $0x10] sm:$0xff]
        %v534 = vld [vmem:[#allocation5 + $0x18] sm:$0xff]
        %v535 = vld [vmem:[#allocation5 + $0x20] sm:$0xff]
        %v536 = vld [vmem:[#allocation5 + $0x28] sm:$0xff]
        %v537 = vld [vmem:[#allocation5 + $0x30] sm:$0xff]
        %v538 = vld [vmem:[#allocation5 + $0x38] sm:$0xff]
        %v539 = vld [vmem:[#allocation5 + $0x40] sm:$0xff]
        %v540 = vld [vmem:[#allocation5 + $0x48] sm:$0xff]
        %v541 = vld [vmem:[#allocation5 + $0x50] sm:$0xff]
        %v542 = vld [vmem:[#allocation5 + $0x58] sm:$0xff]
        %v543 = vld [vmem:[#allocation5 + $0x60] sm:$0xff]
        %v544 = vld [vmem:[#allocation5 + $0x68] sm:$0xff]
        %v545 = vld [vmem:[#allocation5 + $0x70] sm:$0xff]
        %v546 = vld [vmem:[#allocation5 + $0x78] sm:$0xff]
        %v547 = vld [vmem:[#allocation5 + $0x80] sm:$0xff]
        %v548 = vld [vmem:[#allocation5 + $0x88] sm:$0xff]
        %v549 = vld [vmem:[#allocation5 + $0x90] sm:$0xff]
        %v550 = vld [vmem:[#allocation5 + $0x98] sm:$0xff]
        %v551 = vld [vmem:[#allocation5 + $0xa0] sm:$0xff]
        %v552 = vld [vmem:[#allocation5 + $0xa8] sm:$0xff]
        %v553 = vld [vmem:[#allocation5 + $0xb0] sm:$0xff]
        %v554 = vld [vmem:[#allocation5 + $0xb8] sm:$0xff]
        %v555 = vld [vmem:[#allocation5 + $0xc0] sm:$0xff]
        %v556 = vld [vmem:[#allocation5 + $0xc8] sm:$0xff]
        %v557 = vld [vmem:[#allocation5 + $0xd0] sm:$0xff]
        %v558 = vld [vmem:[#allocation5 + $0xd8] sm:$0xff]
        %v559 = vld [vmem:[#allocation5 + $0xe0] sm:$0xff]
        %v560 = vld [vmem:[#allocation5 + $0xe8] sm:$0xff]
        %v561 = vld [vmem:[#allocation5 + $0xf0] sm:$0xff]
        %v562 = vld [vmem:[#allocation5 + $0xf8] sm:$0xff]
        %v563 = vld [vmem:[#allocation5 + $0x100] sm:$0xff]
        %v564 = vld [vmem:[#allocation5 + $0x108] sm:$0xff]
        %v565 = vld [vmem:[#allocation5 + $0x110] sm:$0xff]
        %v566 = vld [vmem:[#allocation5 + $0x118] sm:$0xff]
        %v567 = vld [vmem:[#allocation5 + $0x120] sm:$0xff]
        %v568 = vld [vmem:[#allocation5 + $0x128] sm:$0xff]
        %v569 = vld [vmem:[#allocation5 + $0x130] sm:$0xff]
        %v570 = vld [vmem:[#allocation5 + $0x138] sm:$0xff]
        %v571 = vld [vmem:[#allocation5 + $0x140] sm:$0xff]
        %v572 = vld [vmem:[#allocation5 + $0x148] sm:$0xff]
        %v573 = vld [vmem:[#allocation5 + $0x150] sm:$0xff]
        %v574 = vld [vmem:[#allocation5 + $0x158] sm:$0xff]
        %v575 = vld [vmem:[#allocation5 + $0x160] sm:$0xff]
        %v576 = vld [vmem:[#allocation5 + $0x168] sm:$0xff]
        %v577 = vld [vmem:[#allocation5 + $0x170] sm:$0xff]
        %v578 = vld [vmem:[#allocation5 + $0x178] sm:$0xff]
        %v579 = vld [vmem:[#allocation7] sm:$0xff]
        %v580 = vld [vmem:[#allocation7 + $0x8] sm:$0xff]
        %v581 = vld [vmem:[#allocation7 + $0x10] sm:$0xff]
        %v582 = vld [vmem:[#allocation7 + $0x18] sm:$0xff]
        %v583 = vld [vmem:[#allocation7 + $0x20] sm:$0xff]
        %v584 = vld [vmem:[#allocation7 + $0x28] sm:$0xff]
        %v585 = vld [vmem:[#allocation7 + $0x30] sm:$0xff]
        %v586 = vld [vmem:[#allocation7 + $0x38] sm:$0xff]
        %v587 = vld [vmem:[#allocation7 + $0x40] sm:$0xff]
        %v588 = vld [vmem:[#allocation7 + $0x48] sm:$0xff]
        %v589 = vld [vmem:[#allocation7 + $0x50] sm:$0xff]
        %v590 = vld [vmem:[#allocation7 + $0x58] sm:$0xff]
        %v591 = vld [vmem:[#allocation7 + $0x60] sm:$0xff]
        %v592 = vld [vmem:[#allocation7 + $0x68] sm:$0xff]
        %v593 = vld [vmem:[#allocation7 + $0x70] sm:$0xff]
        %v594 = vld [vmem:[#allocation7 + $0x78] sm:$0xff]
        %v595 = vld [vmem:[#allocation7 + $0x80] sm:$0xff]
        %v596 = vld [vmem:[#allocation7 + $0x88] sm:$0xff]
        %v597 = vld [vmem:[#allocation7 + $0x90] sm:$0xff]
        %v598 = vld [vmem:[#allocation7 + $0x98] sm:$0xff]
        %v599 = vld [vmem:[#allocation7 + $0xa0] sm:$0xff]
        %v600 = vld [vmem:[#allocation7 + $0xa8] sm:$0xff]
        %v601 = vld [vmem:[#allocation7 + $0xb0] sm:$0xff]
        %v602 = vld [vmem:[#allocation7 + $0xb8] sm:$0xff]
        %v603 = vld [vmem:[#allocation7 + $0xc0] sm:$0xff]
        %v604 = vld [vmem:[#allocation7 + $0xc8] sm:$0xff]
        %v605 = vld [vmem:[#allocation7 + $0xd0] sm:$0xff]
        %v606 = vld [vmem:[#allocation7 + $0xd8] sm:$0xff]
        %v607 = vld [vmem:[#allocation7 + $0xe0] sm:$0xff]
        %v608 = vld [vmem:[#allocation7 + $0xe8] sm:$0xff]
        %v609 = vld [vmem:[#allocation7 + $0xf0] sm:$0xff]
        %v610 = vld [vmem:[#allocation7 + $0xf8] sm:$0xff]
        %v611 = vld [vmem:[#allocation7 + $0x100] sm:$0xff]
        %v612 = vld [vmem:[#allocation7 + $0x108] sm:$0xff]
        %v613 = vld [vmem:[#allocation7 + $0x110] sm:$0xff]
        %v614 = vld [vmem:[#allocation7 + $0x118] sm:$0xff]
        %v615 = vld [vmem:[#allocation7 + $0x120] sm:$0xff]
        %v616 = vld [vmem:[#allocation7 + $0x128] sm:$0xff]
        %v617 = vld [vmem:[#allocation7 + $0x130] sm:$0xff]
        %v618 = vld [vmem:[#allocation7 + $0x138] sm:$0xff]
        %v619 = vld [vmem:[#allocation7 + $0x140] sm:$0xff]
        %v620 = vld [vmem:[#allocation7 + $0x148] sm:$0xff]
        %v621 = vld [vmem:[#allocation7 + $0x150] sm:$0xff]
        %v622 = vld [vmem:[#allocation7 + $0x158] sm:$0xff]
        %v623 = vld [vmem:[#allocation7 + $0x160] sm:$0xff]
        %v624 = vld [vmem:[#allocation7 + $0x168] sm:$0xff]
        %v625 = vld [vmem:[#allocation7 + $0x170] sm:$0xff]
        %v626 = vld [vmem:[#allocation7 + $0x178] sm:$0xff]
        %v627 = vld [vmem:[%s2] sm:$0x1]
        %v628 = vld [vmem:[%s4] sm:$0x1]
        %v629 = vrot.slane %v274, 7
        %v630 = vrot.slane %v275, 7
        %v631 = vrot.slane %v276, 7
        %v632 = vrot.slane %v277, 7
        %v633 = vrot.slane %v278, 7
        %v634 = vrot.slane %v279, 7
        %v635 = vrot.slane %v280, 7
        %v636 = vrot.slane %v281, 7
        %v637 = vrot.slane %v282, 7
        %v638 = vrot.slane %v283, 7
        %v639 = vrot.slane %v284, 7
        %v640 = vrot.slane %v285, 7
        %v641 = vrot.slane %v286, 7
        %v642 = vrot.slane %v287, 7
        %v643 = vrot.slane %v288, 7
        %v644 = vrot.slane %v289, 7
        %vm645 = vcmp.lt.s32.totalorder %v291, 1
        %v646 = vsel %vm645, %v643, %v644
        %v647 = vsel %vm645, %v642, %v643
        %v648 = vsel %vm645, %v641, %v642
        %v649 = vsel %vm645, %v640, %v641
        %v650 = vsel %vm645, %v639, %v640
        %v651 = vsel %vm645, %v638, %v639
        %v652 = vsel %vm645, %v637, %v638
        %v653 = vsel %vm645, %v636, %v637
        %v654 = vsel %vm645, %v635, %v636
        %v655 = vsel %vm645, %v634, %v635
        %v656 = vsel %vm645, %v633, %v634
        %v657 = vsel %vm645, %v632, %v633
        %v658 = vsel %vm645, %v631, %v632
        %v659 = vsel %vm645, %v630, %v631
        %v660 = vsel %vm645, %v629, %v630
        %v661 = vsel %vm645, %v644, %v629
        %v662 = vsel %vm499, 1, 0
        %v663 = vsel %vm500, 1, 0
        %v664 = vsel %vm501, 1, 0
        %v665 = vsel %vm502, 1, 0
        %v666 = vsel %vm503, 1, 0
        %v667 = vsel %vm504, 1, 0
        %v668 = vsel %vm505, 1, 0
        %v669 = vsel %vm506, 1, 0
        %v670 = vsel %vm507, 1, 0
        %v671 = vsel %vm508, 1, 0
        %v672 = vsel %vm509, 1, 0
        %v673 = vsel %vm510, 1, 0
        %v674 = vsel %vm511, 1, 0
        %v675 = vsel %vm512, 1, 0
        %v676 = vsel %vm513, 1, 0
        %v677 = vsel %vm514, 1, 0
        %vm678 = vcmp.eq.s32.totalorder %v662, 1
        %vm679 = vcmp.eq.s32.totalorder %v663, 1
        %vm680 = vcmp.eq.s32.totalorder %v664, 1
        %vm681 = vcmp.eq.s32.totalorder %v665, 1
        %vm682 = vcmp.eq.s32.totalorder %v666, 1
        %vm683 = vcmp.eq.s32.totalorder %v667, 1
        %vm684 = vcmp.eq.s32.totalorder %v668, 1
        %vm685 = vcmp.eq.s32.totalorder %v669, 1
        %vm686 = vcmp.eq.s32.totalorder %v670, 1
        %vm687 = vcmp.eq.s32.totalorder %v671, 1
        %vm688 = vcmp.eq.s32.totalorder %v672, 1
        %vm689 = vcmp.eq.s32.totalorder %v673, 1
        %vm690 = vcmp.eq.s32.totalorder %v674, 1
        %vm691 = vcmp.eq.s32.totalorder %v675, 1
        %vm692 = vcmp.eq.s32.totalorder %v676, 1
        %vm693 = vcmp.eq.s32.totalorder %v677, 1
        %v694 = vsel %vm678, %v661, 0.0
        %v695 = vsel %vm679, %v660, 0.0
        %v696 = vsel %vm680, %v659, 0.0
        %v697 = vsel %vm681, %v658, 0.0
        %v698 = vsel %vm682, %v657, 0.0
        %v699 = vsel %vm683, %v656, 0.0
        %v700 = vsel %vm684, %v655, 0.0
        %v701 = vsel %vm685, %v654, 0.0
        %v702 = vsel %vm686, %v653, 0.0
        %v703 = vsel %vm687, %v652, 0.0
        %v704 = vsel %vm688, %v651, 0.0
        %v705 = vsel %vm689, %v650, 0.0
        %v706 = vsel %vm690, %v649, 0.0
        %v707 = vsel %vm691, %v648, 0.0
        %v708 = vsel %vm692, %v647, 0.0
        %v709 = vsel %vm693, %v646, 0.0
        %v710 = vrot.slane %v274, 1
        %v711 = vrot.slane %v275, 1
        %v712 = vrot.slane %v276, 1
        %v713 = vrot.slane %v277, 1
        %v714 = vrot.slane %v278, 1
        %v715 = vrot.slane %v279, 1
        %v716 = vrot.slane %v280, 1
        %v717 = vrot.slane %v281, 1
        %v718 = vrot.slane %v282, 1
        %v719 = vrot.slane %v283, 1
        %v720 = vrot.slane %v284, 1
        %v721 = vrot.slane %v285, 1
        %v722 = vrot.slane %v286, 1
        %v723 = vrot.slane %v287, 1
        %v724 = vrot.slane %v288, 1
        %v725 = vrot.slane %v289, 1
        %vm726 = vcmp.lt.s32.totalorder %v291, 7
        %v727 = vsel %vm726, %v724, %v725
        %v728 = vsel %vm726, %v723, %v724
        %v729 = vsel %vm726, %v722, %v723
        %v730 = vsel %vm726, %v721, %v722
        %v731 = vsel %vm726, %v720, %v721
        %v732 = vsel %vm726, %v719, %v720
        %v733 = vsel %vm726, %v718, %v719
        %v734 = vsel %vm726, %v717, %v718
        %v735 = vsel %vm726, %v716, %v717
        %v736 = vsel %vm726, %v715, %v716
        %v737 = vsel %vm726, %v714, %v715
        %v738 = vsel %vm726, %v713, %v714
        %v739 = vsel %vm726, %v712, %v713
        %v740 = vsel %vm726, %v711, %v712
        %v741 = vsel %vm726, %v710, %v711
        %v742 = vsel %vm726, %v725, %v710
        %v743 = vsel %vm515, 1, 0
        %v744 = vsel %vm516, 1, 0
        %v745 = vsel %vm517, 1, 0
        %v746 = vsel %vm518, 1, 0
        %v747 = vsel %vm519, 1, 0
        %v748 = vsel %vm520, 1, 0
        %v749 = vsel %vm521, 1, 0
        %v750 = vsel %vm522, 1, 0
        %v751 = vsel %vm523, 1, 0
        %v752 = vsel %vm524, 1, 0
        %v753 = vsel %vm525, 1, 0
        %v754 = vsel %vm526, 1, 0
        %v755 = vsel %vm527, 1, 0
        %v756 = vsel %vm528, 1, 0
        %v757 = vsel %vm529, 1, 0
        %v758 = vsel %vm530, 1, 0
        %vm759 = vcmp.eq.s32.totalorder %v743, 1
        %vm760 = vcmp.eq.s32.totalorder %v744, 1
        %vm761 = vcmp.eq.s32.totalorder %v745, 1
        %vm762 = vcmp.eq.s32.totalorder %v746, 1
        %vm763 = vcmp.eq.s32.totalorder %v747, 1
        %vm764 = vcmp.eq.s32.totalorder %v748, 1
        %vm765 = vcmp.eq.s32.totalorder %v749, 1
        %vm766 = vcmp.eq.s32.totalorder %v750, 1
        %vm767 = vcmp.eq.s32.totalorder %v751, 1
        %vm768 = vcmp.eq.s32.totalorder %v752, 1
        %vm769 = vcmp.eq.s32.totalorder %v753, 1
        %vm770 = vcmp.eq.s32.totalorder %v754, 1
        %vm771 = vcmp.eq.s32.totalorder %v755, 1
        %vm772 = vcmp.eq.s32.totalorder %v756, 1
        %vm773 = vcmp.eq.s32.totalorder %v757, 1
        %vm774 = vcmp.eq.s32.totalorder %v758, 1
        %v775 = vsel %vm759, %v741, 0.0
        %v776 = vsel %vm760, %v740, 0.0
        %v777 = vsel %vm761, %v739, 0.0
        %v778 = vsel %vm762, %v738, 0.0
        %v779 = vsel %vm763, %v737, 0.0
        %v780 = vsel %vm764, %v736, 0.0
        %v781 = vsel %vm765, %v735, 0.0
        %v782 = vsel %vm766, %v734, 0.0
        %v783 = vsel %vm767, %v733, 0.0
        %v784 = vsel %vm768, %v732, 0.0
        %v785 = vsel %vm769, %v731, 0.0
        %v786 = vsel %vm770, %v730, 0.0
        %v787 = vsel %vm771, %v729, 0.0
        %v788 = vsel %vm772, %v728, 0.0
        %v789 = vsel %vm773, %v727, 0.0
        %v790 = vsel %vm774, %v742, 0.0
        %v792 = vlaneseq
        %v793 = vshrl.u32 %v792, 7
        %v794 = vsub.s32 0, %v793
        %v795 = vrot.slane %v627, %v794
        %797 = vmatprep.subr.mxu0 0.0
        %798 = vmatpush1.msra.mxu0 %v546
        %799 = vmatprep.subr.mxu0 0.0
        %800 = vmatpush1.msra.mxu0 %v545
        %801 = vmatprep.subr.mxu0 0.0
        %802 = vmatpush1.msra.mxu0 %v544
        %803 = vmatprep.subr.mxu0 0.0
        %804 = vmatpush1.msra.mxu0 %v543
        %805 = vmatprep.subr.mxu0 0.0
        %806 = vmatpush1.msra.mxu0 %v542
        %807 = vmatprep.subr.mxu0 0.0
        %808 = vmatpush1.msra.mxu0 %v541
        %809 = vmatprep.subr.mxu0 0.0
        %810 = vmatpush1.msra.mxu0 %v540
        %811 = vmatprep.subr.mxu0 0.0
        %812 = vmatpush1.msra.mxu0 %v539
        %813 = vmatprep.subr.mxu0 0.0
        %814 = vmatpush1.msra.mxu0 %v538
        %815 = vmatprep.subr.mxu0 0.0
        %816 = vmatpush1.msra.mxu0 %v537
        %817 = vmatprep.subr.mxu0 0.0
        %818 = vmatpush1.msra.mxu0 %v536
        %819 = vmatprep.subr.mxu0 0.0
        %820 = vmatpush1.msra.mxu0 %v535
        %821 = vmatprep.subr.mxu0 0.0
        %822 = vmatpush1.msra.mxu0 %v534
        %823 = vmatprep.subr.mxu0 0.0
        %824 = vmatpush1.msra.mxu0 %v533
        %825 = vmatprep.subr.mxu0 0.0
        %826 = vmatpush1.msra.mxu0 %v532
        %827 = vmatprep.subr.mxu0 0.0
        %828 = vmatpush1.msra.mxu0 %v531
        %829 = vmatprep.subr.mxu0 0.0
        %830 = vmatpush2.msra.mxu0 %v562
        %831 = vmatprep.subr.mxu0 0.0
        %832 = vmatpush2.msra.mxu0 %v561
        %833 = vmatprep.subr.mxu0 0.0
        %834 = vmatpush2.msra.mxu0 %v560
        %835 = vmatprep.subr.mxu0 0.0
        %836 = vmatpush2.msra.mxu0 %v559
        %837 = vmatprep.subr.mxu0 0.0
        %838 = vmatpush2.msra.mxu0 %v558
        %839 = vmatprep.subr.mxu0 0.0
        %840 = vmatpush2.msra.mxu0 %v557
        %841 = vmatprep.subr.mxu0 0.0
        %842 = vmatpush2.msra.mxu0 %v556
        %843 = vmatprep.subr.mxu0 0.0
        %844 = vmatpush2.msra.mxu0 %v555
        %845 = vmatprep.subr.mxu0 0.0
        %846 = vmatpush2.msra.mxu0 %v554
        %847 = vmatprep.subr.mxu0 0.0
        %848 = vmatpush2.msra.mxu0 %v553
        %849 = vmatprep.subr.mxu0 0.0
        %850 = vmatpush2.msra.mxu0 %v552
        %851 = vmatprep.subr.mxu0 0.0
        %852 = vmatpush2.msra.mxu0 %v551
        %853 = vmatprep.subr.mxu0 0.0
        %854 = vmatpush2.msra.mxu0 %v550
        %855 = vmatprep.subr.mxu0 0.0
        %856 = vmatpush2.msra.mxu0 %v549
        %857 = vmatprep.subr.mxu0 0.0
        %858 = vmatpush2.msra.mxu0 %v548
        %859 = vmatprep.subr.mxu0 0.0
        %860 = vmatpush2.msra.mxu0 %v547
        %861 = vmatprep.mubr.f32.mxu0 %v274
        %862 = vmatmul.mubr.f32.gmra.mxu0 %v694
        %v863 = vpop.f32.mrf.mxu0
        %v864 = vadd.f32 %v795, %v863
        %v865 = vpop.f32.mrf.mxu0
        %866 = vmatprep.mubr.f32.mxu0 %v275
        %867 = vmatmul.mubr.f32.gmra.mxu0 %v695
        %v868 = vpop.f32.mrf.mxu0
        %v869 = vadd.f32 %v795, %v868
        %v870 = vpop.f32.mrf.mxu0
        %871 = vmatprep.mubr.f32.mxu0 %v276
        %872 = vmatmul.mubr.f32.gmra.mxu0 %v696
        %v873 = vpop.f32.mrf.mxu0
        %v874 = vadd.f32 %v795, %v873
        %v875 = vpop.f32.mrf.mxu0
        %876 = vmatprep.mubr.f32.mxu0 %v277
        %877 = vmatmul.mubr.f32.gmra.mxu0 %v697
        %v878 = vpop.f32.mrf.mxu0
        %v879 = vadd.f32 %v795, %v878
        %v880 = vpop.f32.mrf.mxu0
        %881 = vmatprep.mubr.f32.mxu0 %v278
        %882 = vmatmul.mubr.f32.gmra.mxu0 %v698
        %v883 = vpop.f32.mrf.mxu0
        %v884 = vadd.f32 %v795, %v883
        %v885 = vpop.f32.mrf.mxu0
        %886 = vmatprep.mubr.f32.mxu0 %v279
        %887 = vmatmul.mubr.f32.gmra.mxu0 %v699
        %v888 = vpop.f32.mrf.mxu0
        %v889 = vadd.f32 %v795, %v888
        %v890 = vpop.f32.mrf.mxu0
        %891 = vmatprep.mubr.f32.mxu0 %v280
        %892 = vmatmul.mubr.f32.gmra.mxu0 %v700
        %v893 = vpop.f32.mrf.mxu0
        %v894 = vadd.f32 %v795, %v893
        %v895 = vpop.f32.mrf.mxu0
        %896 = vmatprep.mubr.f32.mxu0 %v281
        %897 = vmatmul.mubr.f32.gmra.mxu0 %v701
        %v898 = vpop.f32.mrf.mxu0
        %v899 = vadd.f32 %v795, %v898
        %v900 = vpop.f32.mrf.mxu0
        %901 = vmatprep.mubr.f32.mxu0 %v282
        %902 = vmatmul.mubr.f32.gmra.mxu0 %v702
        %v903 = vpop.f32.mrf.mxu0
        %v904 = vadd.f32 %v795, %v903
        %v905 = vpop.f32.mrf.mxu0
        %906 = vmatprep.mubr.f32.mxu0 %v283
        %907 = vmatmul.mubr.f32.gmra.mxu0 %v703
        %v908 = vpop.f32.mrf.mxu0
        %v909 = vadd.f32 %v795, %v908
        %v910 = vpop.f32.mrf.mxu0
        %911 = vmatprep.mubr.f32.mxu0 %v284
        %912 = vmatmul.mubr.f32.gmra.mxu0 %v704
        %v913 = vpop.f32.mrf.mxu0
        %v914 = vadd.f32 %v795, %v913
        %v915 = vpop.f32.mrf.mxu0
        %916 = vmatprep.mubr.f32.mxu0 %v285
        %917 = vmatmul.mubr.f32.gmra.mxu0 %v705
        %v918 = vpop.f32.mrf.mxu0
        %v919 = vadd.f32 %v795, %v918
        %v920 = vpop.f32.mrf.mxu0
        %921 = vmatprep.mubr.f32.mxu0 %v286
        %922 = vmatmul.mubr.f32.gmra.mxu0 %v706
        %v923 = vpop.f32.mrf.mxu0
        %v924 = vadd.f32 %v795, %v923
        %v925 = vpop.f32.mrf.mxu0
        %926 = vmatprep.mubr.f32.mxu0 %v287
        %927 = vmatmul.mubr.f32.gmra.mxu0 %v707
        %v928 = vpop.f32.mrf.mxu0
        %v929 = vadd.f32 %v795, %v928
        %v930 = vpop.f32.mrf.mxu0
        %931 = vmatprep.mubr.f32.mxu0 %v288
        %932 = vmatmul.mubr.f32.gmra.mxu0 %v708
        %v933 = vpop.f32.mrf.mxu0
        %v934 = vadd.f32 %v795, %v933
        %v935 = vpop.f32.mrf.mxu0
        %936 = vmatprep.mubr.f32.mxu0 %v289
        %937 = vmatmul.mubr.f32.gmra.mxu0 %v709
        %v938 = vpop.f32.mrf.mxu0
        %v939 = vadd.f32 %v795, %v938
        %v940 = vpop.f32.mrf.mxu0
        %941 = vdwg.mxu0
        %942 = vmatprep.subr.mxu0 0.0
        %943 = vmatpush1.msra.mxu0 %v578
        %944 = vmatprep.subr.mxu0 0.0
        %945 = vmatpush1.msra.mxu0 %v577
        %946 = vmatprep.subr.mxu0 0.0
        %947 = vmatpush1.msra.mxu0 %v576
        %948 = vmatprep.subr.mxu0 0.0
        %949 = vmatpush1.msra.mxu0 %v575
        %950 = vmatprep.subr.mxu0 0.0
        %951 = vmatpush1.msra.mxu0 %v574
        %952 = vmatprep.subr.mxu0 0.0
        %953 = vmatpush1.msra.mxu0 %v573
        %954 = vmatprep.subr.mxu0 0.0
        %955 = vmatpush1.msra.mxu0 %v572
        %956 = vmatprep.subr.mxu0 0.0
        %957 = vmatpush1.msra.mxu0 %v571
        %958 = vmatprep.subr.mxu0 0.0
        %959 = vmatpush1.msra.mxu0 %v570
        %960 = vmatprep.subr.mxu0 0.0
        %961 = vmatpush1.msra.mxu0 %v569
        %962 = vmatprep.subr.mxu0 0.0
        %963 = vmatpush1.msra.mxu0 %v568
        %964 = vmatprep.subr.mxu0 0.0
        %965 = vmatpush1.msra.mxu0 %v567
        %966 = vmatprep.subr.mxu0 0.0
        %967 = vmatpush1.msra.mxu0 %v566
        %968 = vmatprep.subr.mxu0 0.0
        %969 = vmatpush1.msra.mxu0 %v565
        %970 = vmatprep.subr.mxu0 0.0
        %971 = vmatpush1.msra.mxu0 %v564
        %972 = vmatprep.subr.mxu0 0.0
        %973 = vmatpush1.msra.mxu0 %v563
        %974 = vmatprep.subr.mxu0 0.0
        %975 = vmatpush2.msra.mxu0 0.0
        %976 = vmatprep.subr.mxu0 0.0
        %977 = vmatpush2.msra.mxu0 0.0
        %978 = vmatprep.subr.mxu0 0.0
        %979 = vmatpush2.msra.mxu0 0.0
        %980 = vmatprep.subr.mxu0 0.0
        %981 = vmatpush2.msra.mxu0 0.0
        %982 = vmatprep.subr.mxu0 0.0
        %983 = vmatpush2.msra.mxu0 0.0
        %984 = vmatprep.subr.mxu0 0.0
        %985 = vmatpush2.msra.mxu0 0.0
        %986 = vmatprep.subr.mxu0 0.0
        %987 = vmatpush2.msra.mxu0 0.0
        %988 = vmatprep.subr.mxu0 0.0
        %989 = vmatpush2.msra.mxu0 0.0
        %990 = vmatprep.subr.mxu0 0.0
        %991 = vmatpush2.msra.mxu0 0.0
        %992 = vmatprep.subr.mxu0 0.0
        %993 = vmatpush2.msra.mxu0 0.0
        %994 = vmatprep.subr.mxu0 0.0
        %995 = vmatpush2.msra.mxu0 0.0
        %996 = vmatprep.subr.mxu0 0.0
        %997 = vmatpush2.msra.mxu0 0.0
        %998 = vmatprep.subr.mxu0 0.0
        %999 = vmatpush2.msra.mxu0 0.0
        %1000 = vmatprep.subr.mxu0 0.0
        %1001 = vmatpush2.msra.mxu0 0.0
        %1002 = vmatprep.subr.mxu0 0.0
        %1003 = vmatpush2.msra.mxu0 0.0
        %1004 = vmatprep.subr.mxu0 0.0
        %1005 = vmatpush2.msra.mxu0 0.0
        %1006 = vmatprep.mubr.f32.mxu0 0.0
        %1007 = vmatmul.mubr.f32.gmra.mxu0 %v775
        %v1008 = vpop.f32.mrf.mxu0
        %v1009 = vadd.f32 %v864, %v1008
        %v1010 = vpop.f32.mrf.mxu0
        %1011 = vmatprep.mubr.f32.mxu0 0.0
        %1012 = vmatmul.mubr.f32.gmra.mxu0 %v776
        %v1013 = vpop.f32.mrf.mxu0
        %v1014 = vadd.f32 %v869, %v1013
        %v1015 = vpop.f32.mrf.mxu0
        %1016 = vmatprep.mubr.f32.mxu0 0.0
        %1017 = vmatmul.mubr.f32.gmra.mxu0 %v777
        %v1018 = vpop.f32.mrf.mxu0
        %v1019 = vadd.f32 %v874, %v1018
        %v1020 = vpop.f32.mrf.mxu0
        %1021 = vmatprep.mubr.f32.mxu0 0.0
        %1022 = vmatmul.mubr.f32.gmra.mxu0 %v778
        %v1023 = vpop.f32.mrf.mxu0
        %v1024 = vadd.f32 %v879, %v1023
        %v1025 = vpop.f32.mrf.mxu0
        %1026 = vmatprep.mubr.f32.mxu0 0.0
        %1027 = vmatmul.mubr.f32.gmra.mxu0 %v779
        %v1028 = vpop.f32.mrf.mxu0
        %v1029 = vadd.f32 %v884, %v1028
        %v1030 = vpop.f32.mrf.mxu0
        %1031 = vmatprep.mubr.f32.mxu0 0.0
        %1032 = vmatmul.mubr.f32.gmra.mxu0 %v780
        %v1033 = vpop.f32.mrf.mxu0
        %v1034 = vadd.f32 %v889, %v1033
        %v1035 = vpop.f32.mrf.mxu0
        %1036 = vmatprep.mubr.f32.mxu0 0.0
        %1037 = vmatmul.mubr.f32.gmra.mxu0 %v781
        %v1038 = vpop.f32.mrf.mxu0
        %v1039 = vadd.f32 %v894, %v1038
        %v1040 = vpop.f32.mrf.mxu0
        %1041 = vmatprep.mubr.f32.mxu0 0.0
        %1042 = vmatmul.mubr.f32.gmra.mxu0 %v782
        %v1043 = vpop.f32.mrf.mxu0
        %v1044 = vadd.f32 %v899, %v1043
        %v1045 = vpop.f32.mrf.mxu0
        %1046 = vmatprep.mubr.f32.mxu0 0.0
        %1047 = vmatmul.mubr.f32.gmra.mxu0 %v783
        %v1048 = vpop.f32.mrf.mxu0
        %v1049 = vadd.f32 %v904, %v1048
        %v1050 = vpop.f32.mrf.mxu0
        %1051 = vmatprep.mubr.f32.mxu0 0.0
        %1052 = vmatmul.mubr.f32.gmra.mxu0 %v784
        %v1053 = vpop.f32.mrf.mxu0
        %v1054 = vadd.f32 %v909, %v1053
        %v1055 = vpop.f32.mrf.mxu0
        %1056 = vmatprep.mubr.f32.mxu0 0.0
        %1057 = vmatmul.mubr.f32.gmra.mxu0 %v785
        %v1058 = vpop.f32.mrf.mxu0
        %v1059 = vadd.f32 %v914, %v1058
        %v1060 = vpop.f32.mrf.mxu0
        %1061 = vmatprep.mubr.f32.mxu0 0.0
        %1062 = vmatmul.mubr.f32.gmra.mxu0 %v786
        %v1063 = vpop.f32.mrf.mxu0
        %v1064 = vadd.f32 %v919, %v1063
        %v1065 = vpop.f32.mrf.mxu0
        %1066 = vmatprep.mubr.f32.mxu0 0.0
        %1067 = vmatmul.mubr.f32.gmra.mxu0 %v787
        %v1068 = vpop.f32.mrf.mxu0
        %v1069 = vadd.f32 %v924, %v1068
        %v1070 = vpop.f32.mrf.mxu0
        %1071 = vmatprep.mubr.f32.mxu0 0.0
        %1072 = vmatmul.mubr.f32.gmra.mxu0 %v788
        %v1073 = vpop.f32.mrf.mxu0
        %v1074 = vadd.f32 %v929, %v1073
        %v1075 = vpop.f32.mrf.mxu0
        %1076 = vmatprep.mubr.f32.mxu0 0.0
        %1077 = vmatmul.mubr.f32.gmra.mxu0 %v789
        %v1078 = vpop.f32.mrf.mxu0
        %v1079 = vadd.f32 %v934, %v1078
        %v1080 = vpop.f32.mrf.mxu0
        %1081 = vmatprep.mubr.f32.mxu0 0.0
        %1082 = vmatmul.mubr.f32.gmra.mxu0 %v790
        %v1083 = vpop.f32.mrf.mxu0
        %v1084 = vadd.f32 %v939, %v1083
        %v1085 = vpop.f32.mrf.mxu0
        %1086 = vdwg.mxu0
        %v1087 = vmax.f32 %v1009, 0.0
        %v1088 = vmax.f32 %v1014, 0.0
        %v1089 = vmax.f32 %v1019, 0.0
        %v1090 = vmax.f32 %v1024, 0.0
        %v1091 = vmax.f32 %v1029, 0.0
        %v1092 = vmax.f32 %v1034, 0.0
        %v1093 = vmax.f32 %v1039, 0.0
        %v1094 = vmax.f32 %v1044, 0.0
        %v1095 = vmax.f32 %v1049, 0.0
        %v1096 = vmax.f32 %v1054, 0.0
        %v1097 = vmax.f32 %v1059, 0.0
        %v1098 = vmax.f32 %v1064, 0.0
        %v1099 = vmax.f32 %v1069, 0.0
        %v1100 = vmax.f32 %v1074, 0.0
        %v1101 = vmax.f32 %v1079, 0.0
        %v1102 = vmax.f32 %v1084, 0.0
        %v1103 = vrot.slane %v1087, 7
        %v1104 = vrot.slane %v1088, 7
        %v1105 = vrot.slane %v1089, 7
        %v1106 = vrot.slane %v1090, 7
        %v1107 = vrot.slane %v1091, 7
        %v1108 = vrot.slane %v1092, 7
        %v1109 = vrot.slane %v1093, 7
        %v1110 = vrot.slane %v1094, 7
        %v1111 = vrot.slane %v1095, 7
        %v1112 = vrot.slane %v1096, 7
        %v1113 = vrot.slane %v1097, 7
        %v1114 = vrot.slane %v1098, 7
        %v1115 = vrot.slane %v1099, 7
        %v1116 = vrot.slane %v1100, 7
        %v1117 = vrot.slane %v1101, 7
        %v1118 = vrot.slane %v1102, 7
        %v1119 = vsel %vm645, %v1117, %v1118
        %v1120 = vsel %vm645, %v1116, %v1117
        %v1121 = vsel %vm645, %v1115, %v1116
        %v1122 = vsel %vm645, %v1114, %v1115
        %v1123 = vsel %vm645, %v1113, %v1114
        %v1124 = vsel %vm645, %v1112, %v1113
        %v1125 = vsel %vm645, %v1111, %v1112
        %v1126 = vsel %vm645, %v1110, %v1111
        %v1127 = vsel %vm645, %v1109, %v1110
        %v1128 = vsel %vm645, %v1108, %v1109
        %v1129 = vsel %vm645, %v1107, %v1108
        %v1130 = vsel %vm645, %v1106, %v1107
        %v1131 = vsel %vm645, %v1105, %v1106
        %v1132 = vsel %vm645, %v1104, %v1105
        %v1133 = vsel %vm645, %v1103, %v1104
        %v1134 = vsel %vm645, %v1118, %v1103
        %v1135 = vsel %vm678, %v1134, 0.0
        %v1136 = vsel %vm679, %v1133, 0.0
        %v1137 = vsel %vm680, %v1132, 0.0
        %v1138 = vsel %vm681, %v1131, 0.0
        %v1139 = vsel %vm682, %v1130, 0.0
        %v1140 = vsel %vm683, %v1129, 0.0
        %v1141 = vsel %vm684, %v1128, 0.0
        %v1142 = vsel %vm685, %v1127, 0.0
        %v1143 = vsel %vm686, %v1126, 0.0
        %v1144 = vsel %vm687, %v1125, 0.0
        %v1145 = vsel %vm688, %v1124, 0.0
        %v1146 = vsel %vm689, %v1123, 0.0
        %v1147 = vsel %vm690, %v1122, 0.0
        %v1148 = vsel %vm691, %v1121, 0.0
        %v1149 = vsel %vm692, %v1120, 0.0
        %v1150 = vsel %vm693, %v1119, 0.0
        %v1151 = vrot.slane %v1087, 1
        %v1152 = vrot.slane %v1088, 1
        %v1153 = vrot.slane %v1089, 1
        %v1154 = vrot.slane %v1090, 1
        %v1155 = vrot.slane %v1091, 1
        %v1156 = vrot.slane %v1092, 1
        %v1157 = vrot.slane %v1093, 1
        %v1158 = vrot.slane %v1094, 1
        %v1159 = vrot.slane %v1095, 1
        %v1160 = vrot.slane %v1096, 1
        %v1161 = vrot.slane %v1097, 1
        %v1162 = vrot.slane %v1098, 1
        %v1163 = vrot.slane %v1099, 1
        %v1164 = vrot.slane %v1100, 1
        %v1165 = vrot.slane %v1101, 1
        %v1166 = vrot.slane %v1102, 1
        %v1167 = vsel %vm726, %v1165, %v1166
        %v1168 = vsel %vm726, %v1164, %v1165
        %v1169 = vsel %vm726, %v1163, %v1164
        %v1170 = vsel %vm726, %v1162, %v1163
        %v1171 = vsel %vm726, %v1161, %v1162
        %v1172 = vsel %vm726, %v1160, %v1161
        %v1173 = vsel %vm726, %v1159, %v1160
        %v1174 = vsel %vm726, %v1158, %v1159
        %v1175 = vsel %vm726, %v1157, %v1158
        %v1176 = vsel %vm726, %v1156, %v1157
        %v1177 = vsel %vm726, %v1155, %v1156
        %v1178 = vsel %vm726, %v1154, %v1155
        %v1179 = vsel %vm726, %v1153, %v1154
        %v1180 = vsel %vm726, %v1152, %v1153
        %v1181 = vsel %vm726, %v1151, %v1152
        %v1182 = vsel %vm726, %v1166, %v1151
        %v1183 = vsel %vm759, %v1181, 0.0
        %v1184 = vsel %vm760, %v1180, 0.0
        %v1185 = vsel %vm761, %v1179, 0.0
        %v1186 = vsel %vm762, %v1178, 0.0
        %v1187 = vsel %vm763, %v1177, 0.0
        %v1188 = vsel %vm764, %v1176, 0.0
        %v1189 = vsel %vm765, %v1175, 0.0
        %v1190 = vsel %vm766, %v1174, 0.0
        %v1191 = vsel %vm767, %v1173, 0.0
        %v1192 = vsel %vm768, %v1172, 0.0
        %v1193 = vsel %vm769, %v1171, 0.0
        %v1194 = vsel %vm770, %v1170, 0.0
        %v1195 = vsel %vm771, %v1169, 0.0
        %v1196 = vsel %vm772, %v1168, 0.0
        %v1197 = vsel %vm773, %v1167, 0.0
        %v1198 = vsel %vm774, %v1182, 0.0
        %v1200 = vlaneseq
        %v1201 = vshrl.u32 %v1200, 7
        %v1202 = vsub.s32 0, %v1201
        %v1203 = vrot.slane %v628, %v1202
        %1205 = vmatprep.subr.mxu0 0.0
        %1206 = vmatpush1.msra.mxu0 %v594
        %1207 = vmatprep.subr.mxu0 0.0
        %1208 = vmatpush1.msra.mxu0 %v593
        %1209 = vmatprep.subr.mxu0 0.0
        %1210 = vmatpush1.msra.mxu0 %v592
        %1211 = vmatprep.subr.mxu0 0.0
        %1212 = vmatpush1.msra.mxu0 %v591
        %1213 = vmatprep.subr.mxu0 0.0
        %1214 = vmatpush1.msra.mxu0 %v590
        %1215 = vmatprep.subr.mxu0 0.0
        %1216 = vmatpush1.msra.mxu0 %v589
        %1217 = vmatprep.subr.mxu0 0.0
        %1218 = vmatpush1.msra.mxu0 %v588
        %1219 = vmatprep.subr.mxu0 0.0
        %1220 = vmatpush1.msra.mxu0 %v587
        %1221 = vmatprep.subr.mxu0 0.0
        %1222 = vmatpush1.msra.mxu0 %v586
        %1223 = vmatprep.subr.mxu0 0.0
        %1224 = vmatpush1.msra.mxu0 %v585
        %1225 = vmatprep.subr.mxu0 0.0
        %1226 = vmatpush1.msra.mxu0 %v584
        %1227 = vmatprep.subr.mxu0 0.0
        %1228 = vmatpush1.msra.mxu0 %v583
        %1229 = vmatprep.subr.mxu0 0.0
        %1230 = vmatpush1.msra.mxu0 %v582
        %1231 = vmatprep.subr.mxu0 0.0
        %1232 = vmatpush1.msra.mxu0 %v581
        %1233 = vmatprep.subr.mxu0 0.0
        %1234 = vmatpush1.msra.mxu0 %v580
        %1235 = vmatprep.subr.mxu0 0.0
        %1236 = vmatpush1.msra.mxu0 %v579
        %1237 = vmatprep.subr.mxu0 0.0
        %1238 = vmatpush2.msra.mxu0 %v610
        %1239 = vmatprep.subr.mxu0 0.0
        %1240 = vmatpush2.msra.mxu0 %v609
        %1241 = vmatprep.subr.mxu0 0.0
        %1242 = vmatpush2.msra.mxu0 %v608
        %1243 = vmatprep.subr.mxu0 0.0
        %1244 = vmatpush2.msra.mxu0 %v607
        %1245 = vmatprep.subr.mxu0 0.0
        %1246 = vmatpush2.msra.mxu0 %v606
        %1247 = vmatprep.subr.mxu0 0.0
        %1248 = vmatpush2.msra.mxu0 %v605
        %1249 = vmatprep.subr.mxu0 0.0
        %1250 = vmatpush2.msra.mxu0 %v604
        %1251 = vmatprep.subr.mxu0 0.0
        %1252 = vmatpush2.msra.mxu0 %v603
        %1253 = vmatprep.subr.mxu0 0.0
        %1254 = vmatpush2.msra.mxu0 %v602
        %1255 = vmatprep.subr.mxu0 0.0
        %1256 = vmatpush2.msra.mxu0 %v601
        %1257 = vmatprep.subr.mxu0 0.0
        %1258 = vmatpush2.msra.mxu0 %v600
        %1259 = vmatprep.subr.mxu0 0.0
        %1260 = vmatpush2.msra.mxu0 %v599
        %1261 = vmatprep.subr.mxu0 0.0
        %1262 = vmatpush2.msra.mxu0 %v598
        %1263 = vmatprep.subr.mxu0 0.0
        %1264 = vmatpush2.msra.mxu0 %v597
        %1265 = vmatprep.subr.mxu0 0.0
        %1266 = vmatpush2.msra.mxu0 %v596
        %1267 = vmatprep.subr.mxu0 0.0
        %1268 = vmatpush2.msra.mxu0 %v595
        %1269 = vmatprep.mubr.f32.mxu0 %v1087
        %1270 = vmatmul.mubr.f32.gmra.mxu0 %v1135
        %v1271 = vpop.f32.mrf.mxu0
        %v1272 = vadd.f32 %v1203, %v1271
        %v1273 = vpop.f32.mrf.mxu0
        %1274 = vmatprep.mubr.f32.mxu0 %v1088
        %1275 = vmatmul.mubr.f32.gmra.mxu0 %v1136
        %v1276 = vpop.f32.mrf.mxu0
        %v1277 = vadd.f32 %v1203, %v1276
        %v1278 = vpop.f32.mrf.mxu0
        %1279 = vmatprep.mubr.f32.mxu0 %v1089
        %1280 = vmatmul.mubr.f32.gmra.mxu0 %v1137
        %v1281 = vpop.f32.mrf.mxu0
        %v1282 = vadd.f32 %v1203, %v1281
        %v1283 = vpop.f32.mrf.mxu0
        %1284 = vmatprep.mubr.f32.mxu0 %v1090
        %1285 = vmatmul.mubr.f32.gmra.mxu0 %v1138
        %v1286 = vpop.f32.mrf.mxu0
        %v1287 = vadd.f32 %v1203, %v1286
        %v1288 = vpop.f32.mrf.mxu0
        %1289 = vmatprep.mubr.f32.mxu0 %v1091
        %1290 = vmatmul.mubr.f32.gmra.mxu0 %v1139
        %v1291 = vpop.f32.mrf.mxu0
        %v1292 = vadd.f32 %v1203, %v1291
        %v1293 = vpop.f32.mrf.mxu0
        %1294 = vmatprep.mubr.f32.mxu0 %v1092
        %1295 = vmatmul.mubr.f32.gmra.mxu0 %v1140
        %v1296 = vpop.f32.mrf.mxu0
        %v1297 = vadd.f32 %v1203, %v1296
        %v1298 = vpop.f32.mrf.mxu0
        %1299 = vmatprep.mubr.f32.mxu0 %v1093
        %1300 = vmatmul.mubr.f32.gmra.mxu0 %v1141
        %v1301 = vpop.f32.mrf.mxu0
        %v1302 = vadd.f32 %v1203, %v1301
        %v1303 = vpop.f32.mrf.mxu0
        %1304 = vmatprep.mubr.f32.mxu0 %v1094
        %1305 = vmatmul.mubr.f32.gmra.mxu0 %v1142
        %v1306 = vpop.f32.mrf.mxu0
        %v1307 = vadd.f32 %v1203, %v1306
        %v1308 = vpop.f32.mrf.mxu0
        %1309 = vmatprep.mubr.f32.mxu0 %v1095
        %1310 = vmatmul.mubr.f32.gmra.mxu0 %v1143
        %v1311 = vpop.f32.mrf.mxu0
        %v1312 = vadd.f32 %v1203, %v1311
        %v1313 = vpop.f32.mrf.mxu0
        %1314 = vmatprep.mubr.f32.mxu0 %v1096
        %1315 = vmatmul.mubr.f32.gmra.mxu0 %v1144
        %v1316 = vpop.f32.mrf.mxu0
        %v1317 = vadd.f32 %v1203, %v1316
        %v1318 = vpop.f32.mrf.mxu0
        %1319 = vmatprep.mubr.f32.mxu0 %v1097
        %1320 = vmatmul.mubr.f32.gmra.mxu0 %v1145
        %v1321 = vpop.f32.mrf.mxu0
        %v1322 = vadd.f32 %v1203, %v1321
        %v1323 = vpop.f32.mrf.mxu0
        %1324 = vmatprep.mubr.f32.mxu0 %v1098
        %1325 = vmatmul.mubr.f32.gmra.mxu0 %v1146
        %v1326 = vpop.f32.mrf.mxu0
        %v1327 = vadd.f32 %v1203, %v1326
        %v1328 = vpop.f32.mrf.mxu0
        %1329 = vmatprep.mubr.f32.mxu0 %v1099
        %1330 = vmatmul.mubr.f32.gmra.mxu0 %v1147
        %v1331 = vpop.f32.mrf.mxu0
        %v1332 = vadd.f32 %v1203, %v1331
        %v1333 = vpop.f32.mrf.mxu0
        %1334 = vmatprep.mubr.f32.mxu0 %v1100
        %1335 = vmatmul.mubr.f32.gmra.mxu0 %v1148
        %v1336 = vpop.f32.mrf.mxu0
        %v1337 = vadd.f32 %v1203, %v1336
        %v1338 = vpop.f32.mrf.mxu0
        %1339 = vmatprep.mubr.f32.mxu0 %v1101
        %1340 = vmatmul.mubr.f32.gmra.mxu0 %v1149
        %v1341 = vpop.f32.mrf.mxu0
        %v1342 = vadd.f32 %v1203, %v1341
        %v1343 = vpop.f32.mrf.mxu0
        %1344 = vmatprep.mubr.f32.mxu0 %v1102
        %1345 = vmatmul.mubr.f32.gmra.mxu0 %v1150
        %v1346 = vpop.f32.mrf.mxu0
        %v1347 = vadd.f32 %v1203, %v1346
        %v1348 = vpop.f32.mrf.mxu0
        %1349 = vdwg.mxu0
        %1350 = vmatprep.subr.mxu0 0.0
        %1351 = vmatpush1.msra.mxu0 %v626
        %1352 = vmatprep.subr.mxu0 0.0
        %1353 = vmatpush1.msra.mxu0 %v625
        %1354 = vmatprep.subr.mxu0 0.0
        %1355 = vmatpush1.msra.mxu0 %v624
        %1356 = vmatprep.subr.mxu0 0.0
        %1357 = vmatpush1.msra.mxu0 %v623
        %1358 = vmatprep.subr.mxu0 0.0
        %1359 = vmatpush1.msra.mxu0 %v622
        %1360 = vmatprep.subr.mxu0 0.0
        %1361 = vmatpush1.msra.mxu0 %v621
        %1362 = vmatprep.subr.mxu0 0.0
        %1363 = vmatpush1.msra.mxu0 %v620
        %1364 = vmatprep.subr.mxu0 0.0
        %1365 = vmatpush1.msra.mxu0 %v619
        %1366 = vmatprep.subr.mxu0 0.0
        %1367 = vmatpush1.msra.mxu0 %v618
        %1368 = vmatprep.subr.mxu0 0.0
        %1369 = vmatpush1.msra.mxu0 %v617
        %1370 = vmatprep.subr.mxu0 0.0
        %1371 = vmatpush1.msra.mxu0 %v616
        %1372 = vmatprep.subr.mxu0 0.0
        %1373 = vmatpush1.msra.mxu0 %v615
        %1374 = vmatprep.subr.mxu0 0.0
        %1375 = vmatpush1.msra.mxu0 %v614
        %1376 = vmatprep.subr.mxu0 0.0
        %1377 = vmatpush1.msra.mxu0 %v613
        %1378 = vmatprep.subr.mxu0 0.0
        %1379 = vmatpush1.msra.mxu0 %v612
        %1380 = vmatprep.subr.mxu0 0.0
        %1381 = vmatpush1.msra.mxu0 %v611
        %1382 = vmatprep.subr.mxu0 0.0
        %1383 = vmatpush2.msra.mxu0 0.0
        %1384 = vmatprep.subr.mxu0 0.0
        %1385 = vmatpush2.msra.mxu0 0.0
        %1386 = vmatprep.subr.mxu0 0.0
        %1387 = vmatpush2.msra.mxu0 0.0
        %1388 = vmatprep.subr.mxu0 0.0
        %1389 = vmatpush2.msra.mxu0 0.0
        %1390 = vmatprep.subr.mxu0 0.0
        %1391 = vmatpush2.msra.mxu0 0.0
        %1392 = vmatprep.subr.mxu0 0.0
        %1393 = vmatpush2.msra.mxu0 0.0
        %1394 = vmatprep.subr.mxu0 0.0
        %1395 = vmatpush2.msra.mxu0 0.0
        %1396 = vmatprep.subr.mxu0 0.0
        %1397 = vmatpush2.msra.mxu0 0.0
        %1398 = vmatprep.subr.mxu0 0.0
        %1399 = vmatpush2.msra.mxu0 0.0
        %1400 = vmatprep.subr.mxu0 0.0
        %1401 = vmatpush2.msra.mxu0 0.0
        %1402 = vmatprep.subr.mxu0 0.0
        %1403 = vmatpush2.msra.mxu0 0.0
        %1404 = vmatprep.subr.mxu0 0.0
        %1405 = vmatpush2.msra.mxu0 0.0
        %1406 = vmatprep.subr.mxu0 0.0
        %1407 = vmatpush2.msra.mxu0 0.0
        %1408 = vmatprep.subr.mxu0 0.0
        %1409 = vmatpush2.msra.mxu0 0.0
        %1410 = vmatprep.subr.mxu0 0.0
        %1411 = vmatpush2.msra.mxu0 0.0
        %1412 = vmatprep.subr.mxu0 0.0
        %1413 = vmatpush2.msra.mxu0 0.0
        %1414 = vmatprep.mubr.f32.mxu0 0.0
        %1415 = vmatmul.mubr.f32.gmra.mxu0 %v1183
        %v1416 = vpop.f32.mrf.mxu0
        %v1417 = vadd.f32 %v1272, %v1416
        %v1418 = vpop.f32.mrf.mxu0
        %1419 = vmatprep.mubr.f32.mxu0 0.0
        %1420 = vmatmul.mubr.f32.gmra.mxu0 %v1184
        %v1421 = vpop.f32.mrf.mxu0
        %v1422 = vadd.f32 %v1277, %v1421
        %v1423 = vpop.f32.mrf.mxu0
        %1424 = vmatprep.mubr.f32.mxu0 0.0
        %1425 = vmatmul.mubr.f32.gmra.mxu0 %v1185
        %v1426 = vpop.f32.mrf.mxu0
        %v1427 = vadd.f32 %v1282, %v1426
        %v1428 = vpop.f32.mrf.mxu0
        %1429 = vmatprep.mubr.f32.mxu0 0.0
        %1430 = vmatmul.mubr.f32.gmra.mxu0 %v1186
        %v1431 = vpop.f32.mrf.mxu0
        %v1432 = vadd.f32 %v1287, %v1431
        %v1433 = vpop.f32.mrf.mxu0
        %1434 = vmatprep.mubr.f32.mxu0 0.0
        %1435 = vmatmul.mubr.f32.gmra.mxu0 %v1187
        %v1436 = vpop.f32.mrf.mxu0
        %v1437 = vadd.f32 %v1292, %v1436
        %v1438 = vpop.f32.mrf.mxu0
        %1439 = vmatprep.mubr.f32.mxu0 0.0
        %1440 = vmatmul.mubr.f32.gmra.mxu0 %v1188
        %v1441 = vpop.f32.mrf.mxu0
        %v1442 = vadd.f32 %v1297, %v1441
        %v1443 = vpop.f32.mrf.mxu0
        %1444 = vmatprep.mubr.f32.mxu0 0.0
        %1445 = vmatmul.mubr.f32.gmra.mxu0 %v1189
        %v1446 = vpop.f32.mrf.mxu0
        %v1447 = vadd.f32 %v1302, %v1446
        %v1448 = vpop.f32.mrf.mxu0
        %1449 = vmatprep.mubr.f32.mxu0 0.0
        %1450 = vmatmul.mubr.f32.gmra.mxu0 %v1190
        %v1451 = vpop.f32.mrf.mxu0
        %v1452 = vadd.f32 %v1307, %v1451
        %v1453 = vpop.f32.mrf.mxu0
        %1454 = vmatprep.mubr.f32.mxu0 0.0
        %1455 = vmatmul.mubr.f32.gmra.mxu0 %v1191
        %v1456 = vpop.f32.mrf.mxu0
        %v1457 = vadd.f32 %v1312, %v1456
        %v1458 = vpop.f32.mrf.mxu0
        %1459 = vmatprep.mubr.f32.mxu0 0.0
        %1460 = vmatmul.mubr.f32.gmra.mxu0 %v1192
        %v1461 = vpop.f32.mrf.mxu0
        %v1462 = vadd.f32 %v1317, %v1461
        %v1463 = vpop.f32.mrf.mxu0
        %1464 = vmatprep.mubr.f32.mxu0 0.0
        %1465 = vmatmul.mubr.f32.gmra.mxu0 %v1193
        %v1466 = vpop.f32.mrf.mxu0
        %v1467 = vadd.f32 %v1322, %v1466
        %v1468 = vpop.f32.mrf.mxu0
        %1469 = vmatprep.mubr.f32.mxu0 0.0
        %1470 = vmatmul.mubr.f32.gmra.mxu0 %v1194
        %v1471 = vpop.f32.mrf.mxu0
        %v1472 = vadd.f32 %v1327, %v1471
        %v1473 = vpop.f32.mrf.mxu0
        %1474 = vmatprep.mubr.f32.mxu0 0.0
        %1475 = vmatmul.mubr.f32.gmra.mxu0 %v1195
        %v1476 = vpop.f32.mrf.mxu0
        %v1477 = vadd.f32 %v1332, %v1476
        %v1478 = vpop.f32.mrf.mxu0
        %1479 = vmatprep.mubr.f32.mxu0 0.0
        %1480 = vmatmul.mubr.f32.gmra.mxu0 %v1196
        %v1481 = vpop.f32.mrf.mxu0
        %v1482 = vadd.f32 %v1337, %v1481
        %v1483 = vpop.f32.mrf.mxu0
        %1484 = vmatprep.mubr.f32.mxu0 0.0
        %1485 = vmatmul.mubr.f32.gmra.mxu0 %v1197
        %v1486 = vpop.f32.mrf.mxu0
        %v1487 = vadd.f32 %v1342, %v1486
        %v1488 = vpop.f32.mrf.mxu0
        %1489 = vmatprep.mubr.f32.mxu0 0.0
        %1490 = vmatmul.mubr.f32.gmra.mxu0 %v1198
        %v1491 = vpop.f32.mrf.mxu0
        %v1492 = vadd.f32 %v1347, %v1491
        %v1493 = vpop.f32.mrf.mxu0
        %1494 = vdwg.mxu0
        %v1495 = vadd.f32 %v1417, %v274
        %v1496 = vadd.f32 %v1422, %v275
        %v1497 = vadd.f32 %v1427, %v276
        %v1498 = vadd.f32 %v1432, %v277
        %v1499 = vadd.f32 %v1437, %v278
        %v1500 = vadd.f32 %v1442, %v279
        %v1501 = vadd.f32 %v1447, %v280
        %v1502 = vadd.f32 %v1452, %v281
        %v1503 = vadd.f32 %v1457, %v282
        %v1504 = vadd.f32 %v1462, %v283
        %v1505 = vadd.f32 %v1467, %v284
        %v1506 = vadd.f32 %v1472, %v285
        %v1507 = vadd.f32 %v1477, %v286
        %v1508 = vadd.f32 %v1482, %v287
        %v1509 = vadd.f32 %v1487, %v288
        %v1510 = vadd.f32 %v1492, %v289
        %v1511 = vmax.f32 %v1495, 0.0
        %v1512 = vmax.f32 %v1496, 0.0
        %v1513 = vmax.f32 %v1497, 0.0
        %v1514 = vmax.f32 %v1498, 0.0
        %v1515 = vmax.f32 %v1499, 0.0
        %v1516 = vmax.f32 %v1500, 0.0
        %v1517 = vmax.f32 %v1501, 0.0
        %v1518 = vmax.f32 %v1502, 0.0
        %v1519 = vmax.f32 %v1503, 0.0
        %v1520 = vmax.f32 %v1504, 0.0
        %v1521 = vmax.f32 %v1505, 0.0
        %v1522 = vmax.f32 %v1506, 0.0
        %v1523 = vmax.f32 %v1507, 0.0
        %v1524 = vmax.f32 %v1508, 0.0
        %v1525 = vmax.f32 %v1509, 0.0
        %v1526 = vmax.f32 %v1510, 0.0
        %1527 = vst [vmem:[%s271] sm:$0xff] %v1511
        %1528 = vst [vmem:[%s271 + $0x8] sm:$0xff] %v1512
        %1529 = vst [vmem:[%s271 + $0x10] sm:$0xff] %v1513
        %1530 = vst [vmem:[%s271 + $0x18] sm:$0xff] %v1514
        %1531 = vst [vmem:[%s271 + $0x20] sm:$0xff] %v1515
        %1532 = vst [vmem:[%s271 + $0x28] sm:$0xff] %v1516
        %1533 = vst [vmem:[%s271 + $0x30] sm:$0xff] %v1517
        %1534 = vst [vmem:[%s271 + $0x38] sm:$0xff] %v1518
        %1535 = vst [vmem:[%s271 + $0x40] sm:$0xff] %v1519
        %1536 = vst [vmem:[%s271 + $0x48] sm:$0xff] %v1520
        %1537 = vst [vmem:[%s271 + $0x50] sm:$0xff] %v1521
        %1538 = vst [vmem:[%s271 + $0x58] sm:$0xff] %v1522
        %1539 = vst [vmem:[%s271 + $0x60] sm:$0xff] %v1523
        %1540 = vst [vmem:[%s271 + $0x68] sm:$0xff] %v1524
        %1541 = vst [vmem:[%s271 + $0x70] sm:$0xff] %v1525
        %1542 = vst [vmem:[%s271 + $0x78] sm:$0xff] %v1526
        %s1543 = sand.u32 %s141, 1
        %s1544 = scalar_lea.sflag [#allocation4], %s1543
        %s1545 = sand.u32 %s141, 1
        %s1546 = smul.addr %s1545, 128
        %s1547 = scalar_lea.vmem [#allocation8], %s1546
        // Predicated region
        $region53: #{tpu_custom_call.1} parent=39 // pred_check
          %p1548 = pneg %p151
        $region54: #{tpu_custom_call.1} parent=39 // pred_check_branch
          %1550 = sbr.rel (%p1548) target = $region56
        $region55: #{tpu_custom_call.1} parent=39 // pred_region
          %s1551 = smul.u32 16, %s23
          %s1553 = ssub.s32 2048, 2048
          %1554 = vsyncadd %s1544, %s1553
          %s1555 = smul.addr %s1551, 128
          %s1556 = scalar_lea.hbm %s5, %s1555
          %s1557 = sshll.u32 %s1547, 4
          %s1558 = int_to_ptr.vmem [resolvable:$true] %s1557
          %1563 = dma.vmem_to_hbm [thread:$0]  %s1558, 2048, %s1556, %s1544, 128, 128, 8
        $region56: #{tpu_custom_call.1} parent=39 // pred_fallthru
          _
      $region40: #{tpu_custom_call.1} parent=5 // pred_fallthru
        _
      %p1564 = scmp.le.s32.totalorder 2, %s18
      // Predicated region
      $region57: #{tpu_custom_call.1} parent=5 // pred_check
        %p1565 = pneg %p1564
      $region58: #{tpu_custom_call.1} parent=5 // pred_check_branch
        %1567 = sbr.rel (%p1565) target = $region60
      $region59: #{tpu_custom_call.1} parent=5 // pred_region
        %s1568 = ssub.s32 %s18, 2
        // Predicated region
        $region61: #{tpu_custom_call.1} parent=59 // pred_check
          %p1569 = pneg %p157
        $region62: #{tpu_custom_call.1} parent=59 // pred_check_branch
          %1571 = sbr.rel (%p1569) target = $region64
        $region63: #{tpu_custom_call.1} parent=59 // pred_region
          %s1572 = sand.u32 %s142, 1
          %s1573 = scalar_lea.sflag [#allocation4], %s1572
          %s1574 = sand.u32 %s142, 1
          %s1575 = smul.addr %s1574, 128
          %s1576 = scalar_lea.vmem [#allocation8], %s1575
          %1577 = dma.done %s1573, 2048
        $region64: #{tpu_custom_call.1} parent=59 // pred_fallthru
          _
      $region60: #{tpu_custom_call.1} parent=5 // pred_fallthru
        _
    $region6: #{tpu_custom_call.1} parent=1 // loop_footer
      %s22 = sadd.s32 1, %s18
    $region7: #{tpu_custom_call.1} parent=1 // loop_footer_branch
      %17 = sbr.rel target = $region3
    $region8: #{tpu_custom_call.1} parent=1 // loop_exit
      _
    %1578 = vsyncpa [#allocation3], 1
    %s1579 = scalar_lea.sflag [#allocation3], 1
    %1580 = vsyncpa %s1579, 1
    %1581 = vsyncpa [#allocation6], 1
    %1582 = vsyncpa [#allocation4], 1
    %s1583 = scalar_lea.sflag [#allocation4], 1
    %1584 = vsyncpa %s1583, 1

</llo_original>
